<compile_context>
chip_gen: v7x
topology: tpu7x:2x2x1
jax: 0.10.0
libtpu: 0.0.40
codegen_flags: <defaults>
</compile_context>

<pallas_src>
import jax
import jax.numpy as jnp
from jax.experimental import pallas as pl
from jax.experimental.pallas import tpu as pltpu

# ---------------- configuration (mirrors GCN_TCN.__init__) ----------------
N_NODES   = 90           # forced by fcinput = 90 * 2 + GCN_output
NODE_FEAT = 2
GCN_OUT   = 128
TCN_IN    = 64
TCN_OUT   = 64
GCN_HID   = 32
K_CONV    = 3            # surrogate TCN kernel size (dilation 1)
BN_EPS    = 1e-5
FLAT      = N_NODES * NODE_FEAT   # 180


def _round_up(n, m):
    return ((n + m - 1) // m) * m


def _tcn_rows_per_block(B, T, target=2048):
    """Whole-batch row tiles (multiple of T) that are sublane (8) aligned."""
    qual = [bb * T for bb in range(1, B + 1) if B % bb == 0 and (bb * T) % 8 == 0]
    if not qual:
        return B * T                      # single full-extent block (always legal)
    under = [r for r in qual if r <= target]
    return max(under) if under else min(qual)


# ============================ Pallas kernels ==============================

def gcn_fused_kernel(a_ref, xt_ref, xf_ref,
                     wg_ref, bg_ref, wro_ref, bro_ref, wnc_ref, bnc_ref,
                     wf_ref, wx_ref, bfn_ref, wc_ref, bc_ref,
                     ncls_ref, h_ref, clf_ref):
    """G graphs per grid step, fully fused:
       GCN layer + mean-pool readout -> fn+ReLU -> fc1+log_softmax, plus the
       per-node 2-way head stored lane-dense as (G, 2, 90)."""
    a_t = a_ref[...]                                     # (G, 90, 90) bf16, A^T
    x_t = xt_ref[...]                                    # (G, 2, 90)  f32, X^T
    wg  = wg_ref[...]                                    # (H, 2)      f32

    # K=2 node-feature projection in transposed layout (VPU broadcast FMAs).
    h_lin_t = (wg[None, :, 0:1] * x_t[:, 0:1, :]
               + wg[None, :, 1:2] * x_t[:, 1:2, :])      # (G, H, 90) f32

    # Aggregation: (A @ H)^T == H^T @ A^T -> batched bf16 MXU matmul with a
    # lane-dense (90-wide) result, f32 accumulation.
    h_t = jnp.einsum("gfm,gmn->gfn", h_lin_t.astype(jnp.bfloat16), a_t,
                     preferred_element_type=jnp.float32)
    h_t = jnp.maximum(h_t + bg_ref[...][None, :, :], 0.0)   # (G, H, 90)

    # Graph readout (mean over nodes) + projection to GCN_OUT features.
    pooled = jnp.mean(h_t, axis=-1)                      # (G, H)
    feat = (jnp.dot(pooled.astype(jnp.bfloat16), wro_ref[...],
                    preferred_element_type=jnp.float32) + bro_ref[...])  # (G,128)

    # Per-node 2-way head on the VPU/XLU (no lane-2 MXU push), lane-dense out.
    wnc = wnc_ref[...]                                   # (H, 2) f32
    n0 = jnp.sum(h_t * wnc[None, :, 0:1], axis=1, keepdims=True)   # (G, 1, 90)
    n1 = jnp.sum(h_t * wnc[None, :, 1:2], axis=1, keepdims=True)
    ncls_ref[...] = (jnp.concatenate([n0, n1], axis=1)
                     + bnc_ref[...][None, :, :])         # (G, 2, 90)

    # fn + ReLU (dropout = identity in eval); Wfn is pre-split so the
    # [feat, x_flat] concat is never materialized.
    h_fn = jnp.dot(feat.astype(jnp.bfloat16), wf_ref[...],
                   preferred_element_type=jnp.float32)
    h_fn = h_fn + jnp.dot(xf_ref[...], wx_ref[...],
                          preferred_element_type=jnp.float32)
    h_fn = jnp.maximum(h_fn + bfn_ref[...], 0.0)         # (G, 64)
    h_ref[...] = h_fn

    # fc1 + log_softmax.
    logits = (jnp.dot(h_fn, wc_ref[...], preferred_element_type=jnp.float32)
              + bc_ref[...])
    z = logits - jnp.max(logits, axis=-1, keepdims=True)
    clf_ref[...] = z - jnp.log(jnp.sum(jnp.exp(z), axis=-1, keepdims=True))


def make_tcn_kernel(T):
    def tcn_kernel(h_ref, scale_ref, shift_ref, w1_ref, b1_ref, w2_ref, b2_ref,
                   o_ref):
        """Folded BatchNorm1d + one causal TemporalBlock, time-major rows.

        Row blocks are whole batches (RT = batches_per_block * T), so the
        causal in-batch-time mask also kills cross-batch bleed and no halo is
        needed.  Each conv = K per-tap (RT,C)@(C,C) bf16 matmuls accumulated
        in f32; row shifts use pltpu.roll (XLU) + mask instead of concat."""
        xb = h_ref[...] * scale_ref[...] + shift_ref[...]        # (RT, C) f32
        rows = xb.shape[0]
        tidx = jax.lax.broadcasted_iota(jnp.int32, (rows, 1), 0) % T

        def causal_conv(inp, w_ref, b):
            acc = jnp.dot(inp.astype(jnp.bfloat16), w_ref[K_CONV - 1],
                          preferred_element_type=jnp.float32)    # d = 0 tap
            for k in range(K_CONV - 1):
                d = K_CONV - 1 - k                               # left shift
                rolled = pltpu.roll(inp, shift=d, axis=0)
                tap = jnp.where(tidx >= d, rolled, 0.0).astype(jnp.bfloat16)
                acc = acc + jnp.dot(tap, w_ref[k],
                                    preferred_element_type=jnp.float32)
            return acc + b

        h1 = jnp.maximum(causal_conv(xb, w1_ref, b1_ref[...]), 0.0)
        h2 = jnp.maximum(causal_conv(h1, w2_ref, b2_ref[...]), 0.0)
        o_ref[...] = jnp.maximum(h2 + xb, 0.0)                   # identity residual
    return tcn_kernel


# ============================ wrappers ====================================

def run_gcn_fused(adj_t, x_t, x_flat, params, G):
    BT_pad = adj_t.shape[0]
    p = params
    wg_t  = p["Wg"].T.astype(jnp.float32)                # (H, 2)
    bg_t  = p["bg"].reshape(GCN_HID, 1)
    wro   = p["Wro"].astype(jnp.bfloat16)                # (H, 128)
    wnc   = p["Wnc"].astype(jnp.float32)                 # (H, 2)
    bnc_t = p["bnc"].reshape(2, 1)
    wf    = p["Wfn"][:GCN_OUT].astype(jnp.bfloat16)      # (128, 64)
    wx    = p["Wfn"][GCN_OUT:].astype(jnp.bfloat16)      # (180, 64)

    return pl.pallas_call(
        gcn_fused_kernel,
        out_shape=(jax.ShapeDtypeStruct((BT_pad, 2, N_NODES), jnp.float32),
                   jax.ShapeDtypeStruct((BT_pad, TCN_IN), jnp.float32),
                   jax.ShapeDtypeStruct((BT_pad, 2), jnp.float32)),
        grid=(BT_pad // G,),
        in_specs=[
            pl.BlockSpec((G, N_NODES, N_NODES), lambda i: (i, 0, 0)),
            pl.BlockSpec((G, NODE_FEAT, N_NODES), lambda i: (i, 0, 0)),
            pl.BlockSpec((G, FLAT), lambda i: (i, 0)),
            pl.BlockSpec((GCN_HID, NODE_FEAT), lambda i: (0, 0)),
            pl.BlockSpec((GCN_HID, 1), lambda i: (0, 0)),
            pl.BlockSpec((GCN_HID, GCN_OUT), lambda i: (0, 0)),
            pl.BlockSpec((1, GCN_OUT), lambda i: (0, 0)),
            pl.BlockSpec((GCN_HID, 2), lambda i: (0, 0)),
            pl.BlockSpec((2, 1), lambda i: (0, 0)),
            pl.BlockSpec((GCN_OUT, TCN_IN), lambda i: (0, 0)),
            pl.BlockSpec((FLAT, TCN_IN), lambda i: (0, 0)),
            pl.BlockSpec((1, TCN_IN), lambda i: (0, 0)),
            pl.BlockSpec((TCN_IN, 2), lambda i: (0, 0)),
            pl.BlockSpec((1, 2), lambda i: (0, 0)),
        ],
        out_specs=(pl.BlockSpec((G, 2, N_NODES), lambda i: (i, 0, 0)),
                   pl.BlockSpec((G, TCN_IN), lambda i: (i, 0)),
                   pl.BlockSpec((G, 2), lambda i: (i, 0))),
        compiler_params=pltpu.CompilerParams(
            dimension_semantics=("parallel",),
            vmem_limit_bytes=32 * 1024 * 1024),
    )(adj_t, x_t, x_flat, wg_t, bg_t, wro, p["bro"], wnc, bnc_t,
      wf, wx, p["bfn"], p["Wfc1"], p["bfc1"])


def run_tcn(h, scale, shift, w1, b1, w2, b2, B, T):
    N, C = h.shape
    RT = _tcn_rows_per_block(B, T)
    return pl.pallas_call(
        make_tcn_kernel(T),
        out_shape=jax.ShapeDtypeStruct((N, C), jnp.float32),
        grid=(N // RT,),
        in_specs=[
            pl.BlockSpec((RT, C), lambda i: (i, 0)),
            pl.BlockSpec((1, C), lambda i: (0, 0)),
            pl.BlockSpec((1, C), lambda i: (0, 0)),
            pl.BlockSpec((K_CONV, TCN_IN, TCN_OUT), lambda i: (0, 0, 0)),
            pl.BlockSpec((1, TCN_OUT), lambda i: (0, 0)),
            pl.BlockSpec((K_CONV, TCN_OUT, TCN_OUT), lambda i: (0, 0, 0)),
            pl.BlockSpec((1, TCN_OUT), lambda i: (0, 0)),
        ],
        out_specs=pl.BlockSpec((RT, C), lambda i: (i, 0)),
        compiler_params=pltpu.CompilerParams(
            dimension_semantics=("parallel",),
            vmem_limit_bytes=32 * 1024 * 1024),
    )(h, scale, shift, w1, b1, w2, b2)


# ============================ glue / forward ==============================

def build_adjacency_transposed(edge_index, index_cnt, B, T):
    """torch_geometric dynamic batching replaced by a dense per-(b,t) adjacency
    built from edge_index slices [index_cnt[b,t], index_cnt[b,t+1]).  Stored
    TRANSPOSED (A^T) and in bf16 so the kernel computes H^T @ A^T with a
    lane-dense output.  Edges past index_cnt[b,T] land in an out-of-range time
    slot and are silently dropped by the scatter (intended)."""
    E = edge_index.shape[-1]
    e_ids = jnp.arange(E)
    t_of = jnp.sum(index_cnt[:, 1:, None] <= e_ids[None, None, :], axis=1)  # (B,E)
    b_idx = jnp.broadcast_to(jnp.arange(B)[:, None], (B, E))
    src = edge_index[:, 0, :]
    dst = edge_index[:, 1, :]
    At = jnp.zeros((B, T, N_NODES, N_NODES), jnp.float32)
    At = At.at[b_idx, t_of, dst, src].add(1.0)           # A^T[m, n] = A[n, m]
    At = At + jnp.eye(N_NODES, dtype=jnp.float32)        # self loops
    At = At / jnp.sum(At, axis=-2, keepdims=True)        # == row-normalize of A
    return At.astype(jnp.bfloat16)


def gcn_tcn_forward(data, params, time_length):
    x = data["x"]                              # (B, T, 90, 2)
    B = x.shape[0]
    T = time_length
    BT = B * T
    y = data["y"]

    # TODO(synk): adjacency is still built densely in XLA; a scalar-prefetch
    #             sparse (edge-list) in-kernel aggregation would cut HBM traffic
    #             another ~10-80x.
    adj_t = build_adjacency_transposed(data["edge_index"], data["index_cnt"],
                                       B, T).reshape(BT, N_NODES, N_NODES)
    x_f = x.astype(jnp.float32)
    x_t = x_f.reshape(BT, N_NODES, NODE_FEAT).transpose(0, 2, 1)    # (BT, 2, 90)
    x_flat = x_f.reshape(BT, FLAT).astype(jnp.bfloat16)             # (BT, 180)

    # Pad the graph axis up to a multiple of G (no full-extent fallback block).
    G = min(64, _round_up(BT, 8))
    BT_pad = _round_up(BT, G)
    pad = BT_pad - BT
    if pad:
        adj_t  = jnp.pad(adj_t, ((0, pad), (0, 0), (0, 0)))
        x_t    = jnp.pad(x_t, ((0, pad), (0, 0), (0, 0)))
        x_flat = jnp.pad(x_flat, ((0, pad), (0, 0)))

    # --- fused GCN (surrogate ResGCN.forward_cl) + fn/ReLU + fc1/log_softmax --
    ncls_t, h_fn, clf = run_gcn_fused(adj_t, x_t, x_flat, params, G)
    ncls_t, h_fn, clf = ncls_t[:BT], h_fn[:BT], clf[:BT]

    node_cls = ncls_t.transpose(0, 2, 1).reshape(-1, 2)              # (B*T*90, 2)
    node_label = jnp.repeat(y[:, 0], T * N_NODES).astype(jnp.int32)  # (B*T*90,)

    # --- folded BatchNorm1d + TCN block (time-major, row-tiled, bf16 MXU) ----
    inv = params["bn_gamma"] / jnp.sqrt(params["bn_var"] + BN_EPS)
    scale = inv.reshape(1, TCN_IN)
    shift = (params["bn_beta"] - params["bn_mean"] * inv).reshape(1, TCN_IN)
    W1_t = params["W1"].transpose(0, 2, 1).astype(jnp.bfloat16)      # (K, Cin, Cout)
    W2_t = params["W2"].transpose(0, 2, 1).astype(jnp.bfloat16)

    out_nc = run_tcn(h_fn, scale, shift, W1_t, params["b1"], W2_t, params["b2"],
                     B, T)
    output = out_nc.reshape(B, T, TCN_OUT).transpose(0, 2, 1)        # (B, C, T)

    return output, clf, node_cls, node_label


def init_params(key):
    ks = jax.random.split(key, 12)
    n = lambda k, s: (jax.random.normal(k, s, jnp.float32) * 0.1)
    return {
        "Wg":  n(ks[0], (NODE_FEAT, GCN_HID)), "bg":  n(ks[1], (1, GCN_HID)),
        "Wro": n(ks[2], (GCN_HID, GCN_OUT)),   "bro": n(ks[3], (1, GCN_OUT)),
        "Wnc": n(ks[4], (GCN_HID, 2)),         "bnc": n(ks[5], (1, 2)),
        "Wfn": n(ks[6], (N_NODES * NODE_FEAT + GCN_OUT, TCN_IN)),
        "bfn": n(ks[7], (1, TCN_IN)),
        "Wfc1": n(ks[8], (TCN_IN, 2)),         "bfc1": n(ks[9], (1, 2)),
        "bn_gamma": jnp.ones((TCN_IN,), jnp.float32) * 1.1,
        "bn_beta":  jnp.full((TCN_IN,), 0.05, jnp.float32),
        "bn_mean":  jnp.zeros((TCN_IN,), jnp.float32),
        "bn_var":   jnp.ones((TCN_IN,), jnp.float32),
        "W1": n(ks[10], (K_CONV, TCN_OUT, TCN_IN)),
        "b1": jnp.zeros((1, TCN_OUT), jnp.float32),
        "W2": n(ks[11], (K_CONV, TCN_OUT, TCN_OUT)),
        "b2": jnp.zeros((1, TCN_OUT), jnp.float32),
    }


if __name__ == "__main__":
    B, T, EPG = 2, 4, 10                       # batch, time_length, edges/graph
    key = jax.random.PRNGKey(0)
    k_x, k_e, k_a, k_p = jax.random.split(key, 4)

    x = jax.random.normal(k_x, (B, T, N_NODES, NODE_FEAT), jnp.float32)
    edge_index = jax.random.randint(k_e, (B, 2, T * EPG), 0, N_NODES, jnp.int32)
    edge_attr = jax.random.normal(k_a, (B, T * EPG, 1), jnp.float32)   # unused (surrogate)
    index_cnt = jnp.tile(jnp.arange(T + 1, dtype=jnp.int32) * EPG, (B, 1))
    y = jnp.array([[0], [1]], dtype=jnp.int32)

    data = {"x": x, "edge_index": edge_index, "edge_attr": edge_attr,
            "index_cnt": index_cnt, "y": y}
    params = init_params(k_p)

    output, clf, node_cls, node_label = gcn_tcn_forward(data, params, T)
    jax.block_until_ready((output, clf, node_cls, node_label))

    assert output.shape == (B, TCN_OUT, T)
    assert clf.shape == (B * T, 2)
    assert node_cls.shape == (B * T * N_NODES, 2)
    assert node_label.shape == (B * T * N_NODES,)
    assert bool(jnp.all(jnp.isfinite(output)))
    assert bool(jnp.all(jnp.isfinite(clf)))
    assert bool(jnp.all(jnp.isfinite(node_cls)))
    print("KERNEL_OK")
</pallas_src>

<mosaic_0001>
module attributes {stable_mosaic.version = 11 : i64} {
  func.func @gcn_fused_kernel(%arg0: i32, %arg1: memref<8x90x90xbf16, #tpu.memory_space<vmem>>, %arg2: memref<8x2x90xf32, #tpu.memory_space<vmem>>, %arg3: memref<8x180xbf16, #tpu.memory_space<vmem>>, %arg4: memref<32x2xf32, #tpu.memory_space<vmem>>, %arg5: memref<32x1xf32, #tpu.memory_space<vmem>>, %arg6: memref<32x128xbf16, #tpu.memory_space<vmem>>, %arg7: memref<1x128xf32, #tpu.memory_space<vmem>>, %arg8: memref<32x2xf32, #tpu.memory_space<vmem>>, %arg9: memref<2x1xf32, #tpu.memory_space<vmem>>, %arg10: memref<128x64xbf16, #tpu.memory_space<vmem>>, %arg11: memref<180x64xbf16, #tpu.memory_space<vmem>>, %arg12: memref<1x64xf32, #tpu.memory_space<vmem>>, %arg13: memref<64x2xf32, #tpu.memory_space<vmem>>, %arg14: memref<1x2xf32, #tpu.memory_space<vmem>>, %arg15: memref<8x2x90xf32, #tpu.memory_space<vmem>>, %arg16: memref<8x64xf32, #tpu.memory_space<vmem>>, %arg17: memref<8x2xf32, #tpu.memory_space<vmem>>) attributes {dimension_semantics = [#tpu.dimension_semantics<parallel>], iteration_bounds = array<i64: 1>, scalar_prefetch = 0 : i64, scratch_operands = 0 : i64, tpu.core_type = #tpu.core_type<tc>, window_params = [{transform_indices = @transform_0, window_bounds = array<i64: 8, 90, 90>}, {transform_indices = @transform_1, window_bounds = array<i64: 8, 2, 90>}, {transform_indices = @transform_2, window_bounds = array<i64: 8, 180>}, {pipeline_mode = #tpu.pipeline_mode<synchronous>, transform_indices = @transform_3, window_bounds = array<i64: 32, 2>}, {pipeline_mode = #tpu.pipeline_mode<synchronous>, transform_indices = @transform_4, window_bounds = array<i64: 32, 1>}, {pipeline_mode = #tpu.pipeline_mode<synchronous>, transform_indices = @transform_5, window_bounds = array<i64: 32, 128>}, {pipeline_mode = #tpu.pipeline_mode<synchronous>, transform_indices = @transform_6, window_bounds = array<i64: 1, 128>}, {pipeline_mode = #tpu.pipeline_mode<synchronous>, transform_indices = @transform_7, window_bounds = array<i64: 32, 2>}, {pipeline_mode = #tpu.pipeline_mode<synchronous>, transform_indices = @transform_8, window_bounds = array<i64: 2, 1>}, {pipeline_mode = #tpu.pipeline_mode<synchronous>, transform_indices = @transform_9, window_bounds = array<i64: 128, 64>}, {pipeline_mode = #tpu.pipeline_mode<synchronous>, transform_indices = @transform_10, window_bounds = array<i64: 180, 64>}, {pipeline_mode = #tpu.pipeline_mode<synchronous>, transform_indices = @transform_11, window_bounds = array<i64: 1, 64>}, {pipeline_mode = #tpu.pipeline_mode<synchronous>, transform_indices = @transform_12, window_bounds = array<i64: 64, 2>}, {pipeline_mode = #tpu.pipeline_mode<synchronous>, transform_indices = @transform_13, window_bounds = array<i64: 1, 2>}, {transform_indices = @transform_14, window_bounds = array<i64: 8, 2, 90>}, {transform_indices = @transform_15, window_bounds = array<i64: 8, 64>}, {transform_indices = @transform_16, window_bounds = array<i64: 8, 2>}]} {
    %c0 = arith.constant 0 : index
    %c0_0 = arith.constant 0 : index
    %c0_1 = arith.constant 0 : index
    %0 = vector.load %arg1[%c0, %c0_0, %c0_1] : memref<8x90x90xbf16, #tpu.memory_space<vmem>>, vector<8x90x90xbf16>
    %c0_2 = arith.constant 0 : index
    %c0_3 = arith.constant 0 : index
    %c0_4 = arith.constant 0 : index
    %1 = vector.load %arg2[%c0_2, %c0_3, %c0_4] : memref<8x2x90xf32, #tpu.memory_space<vmem>>, vector<8x2x90xf32>
    %c0_5 = arith.constant 0 : index
    %c0_6 = arith.constant 0 : index
    %2 = vector.load %arg4[%c0_5, %c0_6] : memref<32x2xf32, #tpu.memory_space<vmem>>, vector<32x2xf32>
    %3 = vector.extract_strided_slice %2 {offsets = [0, 0], sizes = [32, 1], strides = [1, 1]} : vector<32x2xf32> to vector<32x1xf32>
    %4 = vector.shape_cast %3 : vector<32x1xf32> to vector<1x32x1xf32>
    %5 = vector.extract_strided_slice %1 {offsets = [0, 0, 0], sizes = [8, 1, 90], strides = [1, 1, 1]} : vector<8x2x90xf32> to vector<8x1x90xf32>
    %6 = vector.broadcast %4 : vector<1x32x1xf32> to vector<8x32x90xf32>
    %7 = vector.broadcast %5 : vector<8x1x90xf32> to vector<8x32x90xf32>
    %8 = arith.mulf %6, %7 : vector<8x32x90xf32>
    %9 = vector.extract_strided_slice %2 {offsets = [0, 1], sizes = [32, 1], strides = [1, 1]} : vector<32x2xf32> to vector<32x1xf32>
    %10 = vector.shape_cast %9 : vector<32x1xf32> to vector<1x32x1xf32>
    %11 = vector.extract_strided_slice %1 {offsets = [0, 1, 0], sizes = [8, 1, 90], strides = [1, 1, 1]} : vector<8x2x90xf32> to vector<8x1x90xf32>
    %12 = vector.broadcast %10 : vector<1x32x1xf32> to vector<8x32x90xf32>
    %13 = vector.broadcast %11 : vector<8x1x90xf32> to vector<8x32x90xf32>
    %14 = arith.mulf %12, %13 : vector<8x32x90xf32>
    %15 = arith.addf %8, %14 : vector<8x32x90xf32>
    %16 = arith.truncf %15 : vector<8x32x90xf32> to vector<8x32x90xbf16>
    "tpu.trace_start"() <{level = 10 : i32, message = "gfm,gmn->gfn"}> : () -> ()
    %cst = arith.constant dense<0.000000e+00> : vector<8x32x90xf32>
    %17 = tpu.matmul %16, %0, %cst {dimension_numbers = #tpu.dot_dimension_numbers<[2], [1], [1], [2], [0, 0, 0, 1, 1, 2], [0], [0]>} : vector<8x32x90xbf16>, vector<8x90x90xbf16>, vector<8x32x90xf32> -> vector<8x32x90xf32>
    "tpu.trace_stop"() : () -> ()
    %c0_7 = arith.constant 0 : index
    %c0_8 = arith.constant 0 : index
    %18 = vector.load %arg5[%c0_7, %c0_8] : memref<32x1xf32, #tpu.memory_space<vmem>>, vector<32x1xf32>
    %19 = vector.shape_cast %18 : vector<32x1xf32> to vector<1x32x1xf32>
    %20 = vector.broadcast %19 : vector<1x32x1xf32> to vector<8x32x90xf32>
    %21 = arith.addf %17, %20 : vector<8x32x90xf32>
    %cst_9 = arith.constant 0.000000e+00 : f32
    %22 = vector.broadcast %cst_9 : f32 to vector<8x32x90xf32>
    %23 = arith.maximumf %21, %22 : vector<8x32x90xf32>
    %cst_10 = arith.constant dense<0.000000e+00> : vector<8x32xf32>
    %24 = vector.multi_reduction <add>, %23, %cst_10 [2] : vector<8x32x90xf32> to vector<8x32xf32>
    %cst_11 = arith.constant 9.000000e+01 : f32
    %25 = vector.broadcast %cst_11 : f32 to vector<8x32xf32>
    %26 = arith.divf %24, %25 : vector<8x32xf32>
    %27 = arith.truncf %26 : vector<8x32xf32> to vector<8x32xbf16>
    %c0_12 = arith.constant 0 : index
    %c0_13 = arith.constant 0 : index
    %28 = vector.load %arg6[%c0_12, %c0_13] : memref<32x128xbf16, #tpu.memory_space<vmem>>, vector<32x128xbf16>
    %cst_14 = arith.constant dense<0.000000e+00> : vector<8x128xf32>
    %29 = tpu.matmul %27, %28, %cst_14 {dimension_numbers = #tpu.dot_dimension_numbers<[1], [0], [0], [1], [0, 0, 1, 1], [], []>} : vector<8x32xbf16>, vector<32x128xbf16>, vector<8x128xf32> -> vector<8x128xf32>
    %c0_15 = arith.constant 0 : index
    %c0_16 = arith.constant 0 : index
    %30 = vector.load %arg7[%c0_15, %c0_16] : memref<1x128xf32, #tpu.memory_space<vmem>>, vector<1x128xf32>
    %31 = vector.broadcast %30 : vector<1x128xf32> to vector<8x128xf32>
    %32 = arith.addf %29, %31 : vector<8x128xf32>
    %c0_17 = arith.constant 0 : index
    %c0_18 = arith.constant 0 : index
    %33 = vector.load %arg8[%c0_17, %c0_18] : memref<32x2xf32, #tpu.memory_space<vmem>>, vector<32x2xf32>
    %34 = vector.extract_strided_slice %33 {offsets = [0, 0], sizes = [32, 1], strides = [1, 1]} : vector<32x2xf32> to vector<32x1xf32>
    %35 = vector.shape_cast %34 : vector<32x1xf32> to vector<1x32x1xf32>
    %36 = vector.broadcast %35 : vector<1x32x1xf32> to vector<8x32x90xf32>
    %37 = arith.mulf %23, %36 : vector<8x32x90xf32>
    %cst_19 = arith.constant dense<0.000000e+00> : vector<8x90xf32>
    %38 = vector.multi_reduction <add>, %37, %cst_19 [1] : vector<8x32x90xf32> to vector<8x90xf32>
    %39 = vector.shape_cast %38 : vector<8x90xf32> to vector<8x1x90xf32>
    %40 = vector.extract_strided_slice %33 {offsets = [0, 1], sizes = [32, 1], strides = [1, 1]} : vector<32x2xf32> to vector<32x1xf32>
    %41 = vector.shape_cast %40 : vector<32x1xf32> to vector<1x32x1xf32>
    %42 = vector.broadcast %41 : vector<1x32x1xf32> to vector<8x32x90xf32>
    %43 = arith.mulf %23, %42 : vector<8x32x90xf32>
    %cst_20 = arith.constant dense<0.000000e+00> : vector<8x90xf32>
    %44 = vector.multi_reduction <add>, %43, %cst_20 [1] : vector<8x32x90xf32> to vector<8x90xf32>
    %45 = vector.shape_cast %44 : vector<8x90xf32> to vector<8x1x90xf32>
    %46 = tpu.concatenate %39, %45 in 1 : vector<8x1x90xf32>, vector<8x1x90xf32> -> vector<8x2x90xf32>
    %c0_21 = arith.constant 0 : index
    %c0_22 = arith.constant 0 : index
    %47 = vector.load %arg9[%c0_21, %c0_22] : memref<2x1xf32, #tpu.memory_space<vmem>>, vector<2x1xf32>
    %48 = vector.shape_cast %47 : vector<2x1xf32> to vector<1x2x1xf32>
    %49 = vector.broadcast %48 : vector<1x2x1xf32> to vector<8x2x90xf32>
    %50 = arith.addf %46, %49 : vector<8x2x90xf32>
    %c0_23 = arith.constant 0 : index
    %c0_24 = arith.constant 0 : index
    %c0_25 = arith.constant 0 : index
    %51 = vector.load %arg15[%c0_23, %c0_24, %c0_25] : memref<8x2x90xf32, #tpu.memory_space<vmem>>, vector<8x2x90xf32>
    tpu.vector_store %arg15[%c0_23, %c0_24, %c0_25], %50 {strides = array<i32>} : memref<8x2x90xf32, #tpu.memory_space<vmem>>, vector<8x2x90xf32>,
    %52 = arith.truncf %32 : vector<8x128xf32> to vector<8x128xbf16>
    %c0_26 = arith.constant 0 : index
    %c0_27 = arith.constant 0 : index
    %53 = vector.load %arg10[%c0_26, %c0_27] : memref<128x64xbf16, #tpu.memory_space<vmem>>, vector<128x64xbf16>
    %cst_28 = arith.constant dense<0.000000e+00> : vector<8x64xf32>
    %54 = tpu.matmul %52, %53, %cst_28 {dimension_numbers = #tpu.dot_dimension_numbers<[1], [0], [0], [1], [0, 0, 1, 1], [], []>} : vector<8x128xbf16>, vector<128x64xbf16>, vector<8x64xf32> -> vector<8x64xf32>
    %c0_29 = arith.constant 0 : index
    %c0_30 = arith.constant 0 : index
    %55 = vector.load %arg3[%c0_29, %c0_30] : memref<8x180xbf16, #tpu.memory_space<vmem>>, vector<8x180xbf16>
    %c0_31 = arith.constant 0 : index
    %c0_32 = arith.constant 0 : index
    %56 = vector.load %arg11[%c0_31, %c0_32] : memref<180x64xbf16, #tpu.memory_space<vmem>>, vector<180x64xbf16>
    %cst_33 = arith.constant dense<0.000000e+00> : vector<8x64xf32>
    %57 = tpu.matmul %55, %56, %cst_33 {dimension_numbers = #tpu.dot_dimension_numbers<[1], [0], [0], [1], [0, 0, 1, 1], [], []>} : vector<8x180xbf16>, vector<180x64xbf16>, vector<8x64xf32> -> vector<8x64xf32>
    %58 = arith.addf %54, %57 : vector<8x64xf32>
    %c0_34 = arith.constant 0 : index
    %c0_35 = arith.constant 0 : index
    %59 = vector.load %arg12[%c0_34, %c0_35] : memref<1x64xf32, #tpu.memory_space<vmem>>, vector<1x64xf32>
    %60 = vector.broadcast %59 : vector<1x64xf32> to vector<8x64xf32>
    %61 = arith.addf %58, %60 : vector<8x64xf32>
    %cst_36 = arith.constant 0.000000e+00 : f32
    %62 = vector.broadcast %cst_36 : f32 to vector<8x64xf32>
    %63 = arith.maximumf %61, %62 : vector<8x64xf32>
    %c0_37 = arith.constant 0 : index
    %c0_38 = arith.constant 0 : index
    %64 = vector.load %arg16[%c0_37, %c0_38] : memref<8x64xf32, #tpu.memory_space<vmem>>, vector<8x64xf32>
    tpu.vector_store %arg16[%c0_37, %c0_38], %63 {strides = array<i32>} : memref<8x64xf32, #tpu.memory_space<vmem>>, vector<8x64xf32>,
    %c0_39 = arith.constant 0 : index
    %c0_40 = arith.constant 0 : index
    %65 = vector.load %arg13[%c0_39, %c0_40] : memref<64x2xf32, #tpu.memory_space<vmem>>, vector<64x2xf32>
    %cst_41 = arith.constant dense<0.000000e+00> : vector<8x2xf32>
    %66 = tpu.matmul %63, %65, %cst_41 {dimension_numbers = #tpu.dot_dimension_numbers<[1], [0], [0], [1], [0, 0, 1, 1], [], []>} : vector<8x64xf32>, vector<64x2xf32>, vector<8x2xf32> -> vector<8x2xf32>
    %c0_42 = arith.constant 0 : index
    %c0_43 = arith.constant 0 : index
    %67 = vector.load %arg14[%c0_42, %c0_43] : memref<1x2xf32, #tpu.memory_space<vmem>>, vector<1x2xf32>
    %68 = vector.broadcast %67 : vector<1x2xf32> to vector<8x2xf32>
    %69 = arith.addf %66, %68 : vector<8x2xf32>
    %cst_44 = arith.constant dense<0xFF800000> : vector<8xf32>
    %70 = vector.multi_reduction <maximumf>, %69, %cst_44 [1] : vector<8x2xf32> to vector<8xf32>
    %71 = vector.shape_cast %70 : vector<8xf32> to vector<8x1xf32>
    %72 = vector.broadcast %71 : vector<8x1xf32> to vector<8x2xf32>
    %73 = arith.subf %69, %72 : vector<8x2xf32>
    %74 = math.exp %73 : vector<8x2xf32>
    %cst_45 = arith.constant dense<0.000000e+00> : vector<8xf32>
    %75 = vector.multi_reduction <add>, %74, %cst_45 [1] : vector<8x2xf32> to vector<8xf32>
    %76 = vector.shape_cast %75 : vector<8xf32> to vector<8x1xf32>
    %77 = math.log %76 : vector<8x1xf32>
    %78 = vector.broadcast %77 : vector<8x1xf32> to vector<8x2xf32>
    %79 = arith.subf %73, %78 : vector<8x2xf32>
    %c0_46 = arith.constant 0 : index
    %c0_47 = arith.constant 0 : index
    %80 = vector.load %arg17[%c0_46, %c0_47] : memref<8x2xf32, #tpu.memory_space<vmem>>, vector<8x2xf32>
    tpu.vector_store %arg17[%c0_46, %c0_47], %79 {strides = array<i32>} : memref<8x2xf32, #tpu.memory_space<vmem>>, vector<8x2xf32>,
    return
  }
  func.func @transform_0(%arg0: i32) -> (i32, i32, i32) {
    %c0_i32 = arith.constant 0 : i32
    %c0_i32_0 = arith.constant 0 : i32
    %c0_i32_1 = arith.constant 0 : i32
    return %arg0, %c0_i32, %c0_i32_0 : i32, i32, i32
  }
  func.func @transform_1(%arg0: i32) -> (i32, i32, i32) {
    %c0_i32 = arith.constant 0 : i32
    %c0_i32_0 = arith.constant 0 : i32
    %c0_i32_1 = arith.constant 0 : i32
    return %arg0, %c0_i32, %c0_i32_0 : i32, i32, i32
  }
  func.func @transform_2(%arg0: i32) -> (i32, i32) {
    %c0_i32 = arith.constant 0 : i32
    %c0_i32_0 = arith.constant 0 : i32
    return %arg0, %c0_i32 : i32, i32
  }
  func.func @transform_3(%arg0: i32) -> (i32, i32) {
    %c0_i32 = arith.constant 0 : i32
    %c0_i32_0 = arith.constant 0 : i32
    %c0_i32_1 = arith.constant 0 : i32
    return %c0_i32, %c0_i32_0 : i32, i32
  }
  func.func @transform_4(%arg0: i32) -> (i32, i32) {
    %c0_i32 = arith.constant 0 : i32
    %c0_i32_0 = arith.constant 0 : i32
    %c0_i32_1 = arith.constant 0 : i32
    return %c0_i32, %c0_i32_0 : i32, i32
  }
  func.func @transform_5(%arg0: i32) -> (i32, i32) {
    %c0_i32 = arith.constant 0 : i32
    %c0_i32_0 = arith.constant 0 : i32
    %c0_i32_1 = arith.constant 0 : i32
    return %c0_i32, %c0_i32_0 : i32, i32
  }
  func.func @transform_6(%arg0: i32) -> (i32, i32) {
    %c0_i32 = arith.constant 0 : i32
    %c0_i32_0 = arith.constant 0 : i32
    %c0_i32_1 = arith.constant 0 : i32
    return %c0_i32, %c0_i32_0 : i32, i32
  }
  func.func @transform_7(%arg0: i32) -> (i32, i32) {
    %c0_i32 = arith.constant 0 : i32
    %c0_i32_0 = arith.constant 0 : i32
    %c0_i32_1 = arith.constant 0 : i32
    return %c0_i32, %c0_i32_0 : i32, i32
  }
  func.func @transform_8(%arg0: i32) -> (i32, i32) {
    %c0_i32 = arith.constant 0 : i32
    %c0_i32_0 = arith.constant 0 : i32
    %c0_i32_1 = arith.constant 0 : i32
    return %c0_i32, %c0_i32_0 : i32, i32
  }
  func.func @transform_9(%arg0: i32) -> (i32, i32) {
    %c0_i32 = arith.constant 0 : i32
    %c0_i32_0 = arith.constant 0 : i32
    %c0_i32_1 = arith.constant 0 : i32
    return %c0_i32, %c0_i32_0 : i32, i32
  }
  func.func @transform_10(%arg0: i32) -> (i32, i32) {
    %c0_i32 = arith.constant 0 : i32
    %c0_i32_0 = arith.constant 0 : i32
    %c0_i32_1 = arith.constant 0 : i32
    return %c0_i32, %c0_i32_0 : i32, i32
  }
  func.func @transform_11(%arg0: i32) -> (i32, i32) {
    %c0_i32 = arith.constant 0 : i32
    %c0_i32_0 = arith.constant 0 : i32
    %c0_i32_1 = arith.constant 0 : i32
    return %c0_i32, %c0_i32_0 : i32, i32
  }
  func.func @transform_12(%arg0: i32) -> (i32, i32) {
    %c0_i32 = arith.constant 0 : i32
    %c0_i32_0 = arith.constant 0 : i32
    %c0_i32_1 = arith.constant 0 : i32
    return %c0_i32, %c0_i32_0 : i32, i32
  }
  func.func @transform_13(%arg0: i32) -> (i32, i32) {
    %c0_i32 = arith.constant 0 : i32
    %c0_i32_0 = arith.constant 0 : i32
    %c0_i32_1 = arith.constant 0 : i32
    return %c0_i32, %c0_i32_0 : i32, i32
  }
  func.func @transform_14(%arg0: i32) -> (i32, i32, i32) {
    %c0_i32 = arith.constant 0 : i32
    %c0_i32_0 = arith.constant 0 : i32
    %c0_i32_1 = arith.constant 0 : i32
    return %arg0, %c0_i32, %c0_i32_0 : i32, i32, i32
  }
  func.func @transform_15(%arg0: i32) -> (i32, i32) {
    %c0_i32 = arith.constant 0 : i32
    %c0_i32_0 = arith.constant 0 : i32
    return %arg0, %c0_i32 : i32, i32
  }
  func.func @transform_16(%arg0: i32) -> (i32, i32) {
    %c0_i32 = arith.constant 0 : i32
    %c0_i32_0 = arith.constant 0 : i32
    return %arg0, %c0_i32 : i32, i32
  }
}

</mosaic_0001>

<llo_original>
// kernel: tpu_custom_call.1
$region0: #{tpu_custom_call.1}
  #allocation0 [shape = 'u32[]', space=smem, size = 0x4, offset = 0x4, fixed_abs, tag = 'smem constant byte address 0x4 - core index']
  #allocation1 [shape = 'u32[144,128]{1,0:T(1,128)}', space=vmem, size = 0x12000, scoped, tag = 'internal scratch']
  %s0 = inlined_call_operand.vmem [shape: bf16[8,90,90], index: 0, kind: input, shape index: {}]
  %s1 = inlined_call_operand.vmem [shape: f32[8,2,90], index: 1, kind: input, shape index: {}]
  %s2 = inlined_call_operand.vmem [shape: bf16[8,180], index: 2, kind: input, shape index: {}]
  %s3 = inlined_call_operand.vmem [shape: f32[32,2], index: 3, kind: input, shape index: {}]
  %s4 = inlined_call_operand.vmem [shape: f32[32,1], index: 4, kind: input, shape index: {}]
  %s5 = inlined_call_operand.vmem [shape: bf16[32,128], index: 5, kind: input, shape index: {}]
  %s6 = inlined_call_operand.vmem [shape: f32[1,128], index: 6, kind: input, shape index: {}]
  %s7 = inlined_call_operand.vmem [shape: f32[32,2], index: 7, kind: input, shape index: {}]
  %s8 = inlined_call_operand.vmem [shape: f32[2,1], index: 8, kind: input, shape index: {}]
  %s9 = inlined_call_operand.vmem [shape: bf16[128,64], index: 9, kind: input, shape index: {}]
  %s10 = inlined_call_operand.vmem [shape: bf16[180,64], index: 10, kind: input, shape index: {}]
  %s11 = inlined_call_operand.vmem [shape: f32[1,64], index: 11, kind: input, shape index: {}]
  %s12 = inlined_call_operand.vmem [shape: f32[64,2], index: 12, kind: input, shape index: {}]
  %s13 = inlined_call_operand.vmem [shape: f32[1,2], index: 13, kind: input, shape index: {}]
  %s14 = inlined_call_operand.hbm [shape: f32[8,2,90], index: 14, kind: output, shape index: {0}]
  %s15 = inlined_call_operand.hbm [shape: f32[8,64], index: 15, kind: output, shape index: {1}]
  %s16 = inlined_call_operand.vmem [shape: f32[8,2], index: 16, kind: output, shape index: {2}]
  %17 = xla_tuple %s14, %s15, %s16
  %s18 = sld [smem:[#allocation0]]
  $region82: #{tpu_custom_call.1} parent=0
    _
  %s20 = ssub.s32 1, %s18
  %s21 = scalar_select 0, %s20, %s18
  $region1: #{tpu_custom_call.1} parent=0
    #allocation2 [shape = 'u8[8192]{0}', space=vmem, size = 0x2000, scoped, tag = 'output window, operand 0, single buffered']
    #allocation3 [shape = 's32[1]{0}', space=sflag, size = 0x4, scoped, tag = 'scoped memory for tpu_custom_call.1']
    #allocation4 [shape = 'u8[4096]{0}', space=vmem, size = 0x1000, scoped, tag = 'output window, operand 1, single buffered']
    #allocation5 [shape = 's32[1]{0}', space=sflag, size = 0x4, scoped, tag = 'scoped memory for tpu_custom_call.1']
    %22 = vsyncpa [#allocation3], 0
    %23 = vsyncpa [#allocation5], 0
    // Predicated region
    $region2: #{tpu_custom_call.1} parent=1 // pred_check
      _
    $region3: #{tpu_custom_call.1} parent=1 // pred_check_branch
      %25 = sbr.rel (0) target = $region5
    $region4: #{tpu_custom_call.1} parent=1 // pred_region
      _
    $region5: #{tpu_custom_call.1} parent=1 // pred_fallthru
      _
    // Predicated region
    $region6: #{tpu_custom_call.1} parent=1 // pred_check
      _
    $region7: #{tpu_custom_call.1} parent=1 // pred_check_branch
      %27 = sbr.rel (0) target = $region9
    $region8: #{tpu_custom_call.1} parent=1 // pred_region
      _
    $region9: #{tpu_custom_call.1} parent=1 // pred_fallthru
      _
    // Predicated region
    $region10: #{tpu_custom_call.1} parent=1 // pred_check
      _
    $region11: #{tpu_custom_call.1} parent=1 // pred_check_branch
      %29 = sbr.rel (0) target = $region13
    $region12: #{tpu_custom_call.1} parent=1 // pred_region
      _
    $region13: #{tpu_custom_call.1} parent=1 // pred_fallthru
      _
    // Predicated region
    $region14: #{tpu_custom_call.1} parent=1 // pred_check
      _
    $region15: #{tpu_custom_call.1} parent=1 // pred_check_branch
      %31 = sbr.rel (0) target = $region17
    $region16: #{tpu_custom_call.1} parent=1 // pred_region
      _
    $region17: #{tpu_custom_call.1} parent=1 // pred_fallthru
      _
    // Predicated region
    $region18: #{tpu_custom_call.1} parent=1 // pred_check
      _
    $region19: #{tpu_custom_call.1} parent=1 // pred_check_branch
      %33 = sbr.rel (0) target = $region21
    $region20: #{tpu_custom_call.1} parent=1 // pred_region
      _
    $region21: #{tpu_custom_call.1} parent=1 // pred_fallthru
      _
    // Predicated region
    $region22: #{tpu_custom_call.1} parent=1 // pred_check
      _
    $region23: #{tpu_custom_call.1} parent=1 // pred_check_branch
      %35 = sbr.rel (0) target = $region25
    $region24: #{tpu_custom_call.1} parent=1 // pred_region
      _
    $region25: #{tpu_custom_call.1} parent=1 // pred_fallthru
      _
    // Predicated region
    $region26: #{tpu_custom_call.1} parent=1 // pred_check
      _
    $region27: #{tpu_custom_call.1} parent=1 // pred_check_branch
      %37 = sbr.rel (0) target = $region29
    $region28: #{tpu_custom_call.1} parent=1 // pred_region
      _
    $region29: #{tpu_custom_call.1} parent=1 // pred_fallthru
      _
    // Predicated region
    $region30: #{tpu_custom_call.1} parent=1 // pred_check
      _
    $region31: #{tpu_custom_call.1} parent=1 // pred_check_branch
      %39 = sbr.rel (0) target = $region33
    $region32: #{tpu_custom_call.1} parent=1 // pred_region
      _
    $region33: #{tpu_custom_call.1} parent=1 // pred_fallthru
      _
    // Predicated region
    $region34: #{tpu_custom_call.1} parent=1 // pred_check
      _
    $region35: #{tpu_custom_call.1} parent=1 // pred_check_branch
      %41 = sbr.rel (0) target = $region37
    $region36: #{tpu_custom_call.1} parent=1 // pred_region
      _
    $region37: #{tpu_custom_call.1} parent=1 // pred_fallthru
      _
    // Predicated region
    $region38: #{tpu_custom_call.1} parent=1 // pred_check
      _
    $region39: #{tpu_custom_call.1} parent=1 // pred_check_branch
      %43 = sbr.rel (0) target = $region41
    $region40: #{tpu_custom_call.1} parent=1 // pred_region
      _
    $region41: #{tpu_custom_call.1} parent=1 // pred_fallthru
      _
    // Predicated region
    $region42: #{tpu_custom_call.1} parent=1 // pred_check
      _
    $region43: #{tpu_custom_call.1} parent=1 // pred_check_branch
      %45 = sbr.rel (0) target = $region45
    $region44: #{tpu_custom_call.1} parent=1 // pred_region
      _
    $region45: #{tpu_custom_call.1} parent=1 // pred_fallthru
      _
    // Predicated region
    $region46: #{tpu_custom_call.1} parent=1 // pred_check
      _
    $region47: #{tpu_custom_call.1} parent=1 // pred_check_branch
      %47 = sbr.rel (0) target = $region49
    $region48: #{tpu_custom_call.1} parent=1 // pred_region
      _
    $region49: #{tpu_custom_call.1} parent=1 // pred_fallthru
      _
    // Predicated region
    $region50: #{tpu_custom_call.1} parent=1 // pred_check
      _
    $region51: #{tpu_custom_call.1} parent=1 // pred_check_branch
      %49 = sbr.rel (0) target = $region53
    $region52: #{tpu_custom_call.1} parent=1 // pred_region
      _
    $region53: #{tpu_custom_call.1} parent=1 // pred_fallthru
      _
    // Predicated region
    $region54: #{tpu_custom_call.1} parent=1 // pred_check
      _
    $region55: #{tpu_custom_call.1} parent=1 // pred_check_branch
      %51 = sbr.rel (0) target = $region57
    $region56: #{tpu_custom_call.1} parent=1 // pred_region
      _
    $region57: #{tpu_custom_call.1} parent=1 // pred_fallthru
      _
    %v53 = vld [vmem:[%s0] sm:$0xf]
    %v54 = vld [vmem:[%s0 + $0x4] sm:$0xf]
    %v55 = vld [vmem:[%s0 + $0x8] sm:$0xf]
    %v56 = vld [vmem:[%s0 + $0xc] sm:$0xf]
    %v57 = vld [vmem:[%s0 + $0x10] sm:$0xf]
    %v58 = vld [vmem:[%s0 + $0x14] sm:$0xf]
    %v59 = vld [vmem:[%s0 + $0x18] sm:$0xf]
    %v60 = vld [vmem:[%s0 + $0x1c] sm:$0xf]
    %v61 = vld [vmem:[%s0 + $0x20] sm:$0xf]
    %v62 = vld [vmem:[%s0 + $0x24] sm:$0xf]
    %v63 = vld [vmem:[%s0 + $0x28] sm:$0xf]
    %v64 = vld [vmem:[%s0 + $0x2c] sm:$0x1]
    %v65 = vld [vmem:[%s0 + $0x30] sm:$0xf]
    %v66 = vld [vmem:[%s0 + $0x34] sm:$0xf]
    %v67 = vld [vmem:[%s0 + $0x38] sm:$0xf]
    %v68 = vld [vmem:[%s0 + $0x3c] sm:$0xf]
    %v69 = vld [vmem:[%s0 + $0x40] sm:$0xf]
    %v70 = vld [vmem:[%s0 + $0x44] sm:$0xf]
    %v71 = vld [vmem:[%s0 + $0x48] sm:$0xf]
    %v72 = vld [vmem:[%s0 + $0x4c] sm:$0xf]
    %v73 = vld [vmem:[%s0 + $0x50] sm:$0xf]
    %v74 = vld [vmem:[%s0 + $0x54] sm:$0xf]
    %v75 = vld [vmem:[%s0 + $0x58] sm:$0xf]
    %v76 = vld [vmem:[%s0 + $0x5c] sm:$0x1]
    %v77 = vld [vmem:[%s0 + $0x60] sm:$0xf]
    %v78 = vld [vmem:[%s0 + $0x64] sm:$0xf]
    %v79 = vld [vmem:[%s0 + $0x68] sm:$0xf]
    %v80 = vld [vmem:[%s0 + $0x6c] sm:$0xf]
    %v81 = vld [vmem:[%s0 + $0x70] sm:$0xf]
    %v82 = vld [vmem:[%s0 + $0x74] sm:$0xf]
    %v83 = vld [vmem:[%s0 + $0x78] sm:$0xf]
    %v84 = vld [vmem:[%s0 + $0x7c] sm:$0xf]
    %v85 = vld [vmem:[%s0 + $0x80] sm:$0xf]
    %v86 = vld [vmem:[%s0 + $0x84] sm:$0xf]
    %v87 = vld [vmem:[%s0 + $0x88] sm:$0xf]
    %v88 = vld [vmem:[%s0 + $0x8c] sm:$0x1]
    %v89 = vld [vmem:[%s0 + $0x90] sm:$0xf]
    %v90 = vld [vmem:[%s0 + $0x94] sm:$0xf]
    %v91 = vld [vmem:[%s0 + $0x98] sm:$0xf]
    %v92 = vld [vmem:[%s0 + $0x9c] sm:$0xf]
    %v93 = vld [vmem:[%s0 + $0xa0] sm:$0xf]
    %v94 = vld [vmem:[%s0 + $0xa4] sm:$0xf]
    %v95 = vld [vmem:[%s0 + $0xa8] sm:$0xf]
    %v96 = vld [vmem:[%s0 + $0xac] sm:$0xf]
    %v97 = vld [vmem:[%s0 + $0xb0] sm:$0xf]
    %v98 = vld [vmem:[%s0 + $0xb4] sm:$0xf]
    %v99 = vld [vmem:[%s0 + $0xb8] sm:$0xf]
    %v100 = vld [vmem:[%s0 + $0xbc] sm:$0x1]
    %v101 = vld [vmem:[%s0 + $0xc0] sm:$0xf]
    %v102 = vld [vmem:[%s0 + $0xc4] sm:$0xf]
    %v103 = vld [vmem:[%s0 + $0xc8] sm:$0xf]
    %v104 = vld [vmem:[%s0 + $0xcc] sm:$0xf]
    %v105 = vld [vmem:[%s0 + $0xd0] sm:$0xf]
    %v106 = vld [vmem:[%s0 + $0xd4] sm:$0xf]
    %v107 = vld [vmem:[%s0 + $0xd8] sm:$0xf]
    %v108 = vld [vmem:[%s0 + $0xdc] sm:$0xf]
    %v109 = vld [vmem:[%s0 + $0xe0] sm:$0xf]
    %v110 = vld [vmem:[%s0 + $0xe4] sm:$0xf]
    %v111 = vld [vmem:[%s0 + $0xe8] sm:$0xf]
    %v112 = vld [vmem:[%s0 + $0xec] sm:$0x1]
    %v113 = vld [vmem:[%s0 + $0xf0] sm:$0xf]
    %v114 = vld [vmem:[%s0 + $0xf4] sm:$0xf]
    %v115 = vld [vmem:[%s0 + $0xf8] sm:$0xf]
    %v116 = vld [vmem:[%s0 + $0xfc] sm:$0xf]
    %v117 = vld [vmem:[%s0 + $0x100] sm:$0xf]
    %v118 = vld [vmem:[%s0 + $0x104] sm:$0xf]
    %v119 = vld [vmem:[%s0 + $0x108] sm:$0xf]
    %v120 = vld [vmem:[%s0 + $0x10c] sm:$0xf]
    %v121 = vld [vmem:[%s0 + $0x110] sm:$0xf]
    %v122 = vld [vmem:[%s0 + $0x114] sm:$0xf]
    %v123 = vld [vmem:[%s0 + $0x118] sm:$0xf]
    %v124 = vld [vmem:[%s0 + $0x11c] sm:$0x1]
    %v125 = vld [vmem:[%s0 + $0x120] sm:$0xf]
    %v126 = vld [vmem:[%s0 + $0x124] sm:$0xf]
    %v127 = vld [vmem:[%s0 + $0x128] sm:$0xf]
    %v128 = vld [vmem:[%s0 + $0x12c] sm:$0xf]
    %v129 = vld [vmem:[%s0 + $0x130] sm:$0xf]
    %v130 = vld [vmem:[%s0 + $0x134] sm:$0xf]
    %v131 = vld [vmem:[%s0 + $0x138] sm:$0xf]
    %v132 = vld [vmem:[%s0 + $0x13c] sm:$0xf]
    %v133 = vld [vmem:[%s0 + $0x140] sm:$0xf]
    %v134 = vld [vmem:[%s0 + $0x144] sm:$0xf]
    %v135 = vld [vmem:[%s0 + $0x148] sm:$0xf]
    %v136 = vld [vmem:[%s0 + $0x14c] sm:$0x1]
    %v137 = vld [vmem:[%s0 + $0x150] sm:$0xf]
    %v138 = vld [vmem:[%s0 + $0x154] sm:$0xf]
    %v139 = vld [vmem:[%s0 + $0x158] sm:$0xf]
    %v140 = vld [vmem:[%s0 + $0x15c] sm:$0xf]
    %v141 = vld [vmem:[%s0 + $0x160] sm:$0xf]
    %v142 = vld [vmem:[%s0 + $0x164] sm:$0xf]
    %v143 = vld [vmem:[%s0 + $0x168] sm:$0xf]
    %v144 = vld [vmem:[%s0 + $0x16c] sm:$0xf]
    %v145 = vld [vmem:[%s0 + $0x170] sm:$0xf]
    %v146 = vld [vmem:[%s0 + $0x174] sm:$0xf]
    %v147 = vld [vmem:[%s0 + $0x178] sm:$0xf]
    %v148 = vld [vmem:[%s0 + $0x17c] sm:$0x1]
    %v149 = vld [vmem:[%s1] sm:$0x3]
    %v150 = vld [vmem:[%s1 + $0x2] sm:$0x3]
    %v151 = vld [vmem:[%s1 + $0x4] sm:$0x3]
    %v152 = vld [vmem:[%s1 + $0x6] sm:$0x3]
    %v153 = vld [vmem:[%s1 + $0x8] sm:$0x3]
    %v154 = vld [vmem:[%s1 + $0xa] sm:$0x3]
    %v155 = vld [vmem:[%s1 + $0xc] sm:$0x3]
    %v156 = vld [vmem:[%s1 + $0xe] sm:$0x3]
    %v157 = vld [vmem:[%s3] sm:$0xff]
    %v158 = vld [vmem:[%s3 + $0x8] sm:$0xff]
    %v159 = vld [vmem:[%s3 + $0x10] sm:$0xff]
    %v160 = vld [vmem:[%s3 + $0x18] sm:$0xff]
    %162 = vset.pattern.permute.xlu0 0
    %163 = vperm.xlu0 %162, %v157
    %v164 = vpop.permute.xlu0 %163
    %167 = vset.pattern.permute.xlu0 0
    %168 = vperm.xlu0 %167, %v158
    %v169 = vpop.permute.xlu0 %168
    %172 = vset.pattern.permute.xlu0 0
    %173 = vperm.xlu0 %172, %v159
    %v174 = vpop.permute.xlu0 %173
    %177 = vset.pattern.permute.xlu0 0
    %178 = vperm.xlu0 %177, %v160
    %v179 = vpop.permute.xlu0 %178
    %v181 = vlaneseq
    %v182 = vshrl.u32 %v181, 7
    %v183 = vsub.s32 0, %v182
    %v184 = vrot.slane %v149, %v183
    %v185 = vlaneseq
    %v186 = vshrl.u32 %v185, 7
    %v187 = vsub.s32 0, %v186
    %v188 = vrot.slane %v150, %v187
    %v189 = vlaneseq
    %v190 = vshrl.u32 %v189, 7
    %v191 = vsub.s32 0, %v190
    %v192 = vrot.slane %v151, %v191
    %v193 = vlaneseq
    %v194 = vshrl.u32 %v193, 7
    %v195 = vsub.s32 0, %v194
    %v196 = vrot.slane %v152, %v195
    %v197 = vlaneseq
    %v198 = vshrl.u32 %v197, 7
    %v199 = vsub.s32 0, %v198
    %v200 = vrot.slane %v153, %v199
    %v201 = vlaneseq
    %v202 = vshrl.u32 %v201, 7
    %v203 = vsub.s32 0, %v202
    %v204 = vrot.slane %v154, %v203
    %v205 = vlaneseq
    %v206 = vshrl.u32 %v205, 7
    %v207 = vsub.s32 0, %v206
    %v208 = vrot.slane %v155, %v207
    %v209 = vlaneseq
    %v210 = vshrl.u32 %v209, 7
    %v211 = vsub.s32 0, %v210
    %v212 = vrot.slane %v156, %v211
    %v213 = vmul.f32 %v164, %v184
    %v214 = vmul.f32 %v169, %v184
    %v215 = vmul.f32 %v174, %v184
    %v216 = vmul.f32 %v179, %v184
    %v217 = vmul.f32 %v164, %v188
    %v218 = vmul.f32 %v169, %v188
    %v219 = vmul.f32 %v174, %v188
    %v220 = vmul.f32 %v179, %v188
    %v221 = vmul.f32 %v164, %v192
    %v222 = vmul.f32 %v169, %v192
    %v223 = vmul.f32 %v174, %v192
    %v224 = vmul.f32 %v179, %v192
    %v225 = vmul.f32 %v164, %v196
    %v226 = vmul.f32 %v169, %v196
    %v227 = vmul.f32 %v174, %v196
    %v228 = vmul.f32 %v179, %v196
    %v229 = vmul.f32 %v164, %v200
    %v230 = vmul.f32 %v169, %v200
    %v231 = vmul.f32 %v174, %v200
    %v232 = vmul.f32 %v179, %v200
    %v233 = vmul.f32 %v164, %v204
    %v234 = vmul.f32 %v169, %v204
    %v235 = vmul.f32 %v174, %v204
    %v236 = vmul.f32 %v179, %v204
    %v237 = vmul.f32 %v164, %v208
    %v238 = vmul.f32 %v169, %v208
    %v239 = vmul.f32 %v174, %v208
    %v240 = vmul.f32 %v179, %v208
    %v241 = vmul.f32 %v164, %v212
    %v242 = vmul.f32 %v169, %v212
    %v243 = vmul.f32 %v174, %v212
    %v244 = vmul.f32 %v179, %v212
    %245 = vset.pattern.permute.xlu0 1
    %246 = vperm.xlu0 %245, %v157
    %v247 = vpop.permute.xlu0 %246
    %249 = vset.pattern.permute.xlu0 1
    %250 = vperm.xlu0 %249, %v158
    %v251 = vpop.permute.xlu0 %250
    %253 = vset.pattern.permute.xlu0 1
    %254 = vperm.xlu0 %253, %v159
    %v255 = vpop.permute.xlu0 %254
    %257 = vset.pattern.permute.xlu0 1
    %258 = vperm.xlu0 %257, %v160
    %v259 = vpop.permute.xlu0 %258
    %v261 = vlaneseq
    %v262 = vshrl.u32 %v261, 7
    %v263 = vsub.s32 1, %v262
    %v264 = vrot.slane %v149, %v263
    %v265 = vlaneseq
    %v266 = vshrl.u32 %v265, 7
    %v267 = vsub.s32 1, %v266
    %v268 = vrot.slane %v150, %v267
    %v269 = vlaneseq
    %v270 = vshrl.u32 %v269, 7
    %v271 = vsub.s32 1, %v270
    %v272 = vrot.slane %v151, %v271
    %v273 = vlaneseq
    %v274 = vshrl.u32 %v273, 7
    %v275 = vsub.s32 1, %v274
    %v276 = vrot.slane %v152, %v275
    %v277 = vlaneseq
    %v278 = vshrl.u32 %v277, 7
    %v279 = vsub.s32 1, %v278
    %v280 = vrot.slane %v153, %v279
    %v281 = vlaneseq
    %v282 = vshrl.u32 %v281, 7
    %v283 = vsub.s32 1, %v282
    %v284 = vrot.slane %v154, %v283
    %v285 = vlaneseq
    %v286 = vshrl.u32 %v285, 7
    %v287 = vsub.s32 1, %v286
    %v288 = vrot.slane %v155, %v287
    %v289 = vlaneseq
    %v290 = vshrl.u32 %v289, 7
    %v291 = vsub.s32 1, %v290
    %v292 = vrot.slane %v156, %v291
    %v293 = vmul.f32 %v247, %v264
    %v294 = vmul.f32 %v251, %v264
    %v295 = vmul.f32 %v255, %v264
    %v296 = vmul.f32 %v259, %v264
    %v297 = vmul.f32 %v247, %v268
    %v298 = vmul.f32 %v251, %v268
    %v299 = vmul.f32 %v255, %v268
    %v300 = vmul.f32 %v259, %v268
    %v301 = vmul.f32 %v247, %v272
    %v302 = vmul.f32 %v251, %v272
    %v303 = vmul.f32 %v255, %v272
    %v304 = vmul.f32 %v259, %v272
    %v305 = vmul.f32 %v247, %v276
    %v306 = vmul.f32 %v251, %v276
    %v307 = vmul.f32 %v255, %v276
    %v308 = vmul.f32 %v259, %v276
    %v309 = vmul.f32 %v247, %v280
    %v310 = vmul.f32 %v251, %v280
    %v311 = vmul.f32 %v255, %v280
    %v312 = vmul.f32 %v259, %v280
    %v313 = vmul.f32 %v247, %v284
    %v314 = vmul.f32 %v251, %v284
    %v315 = vmul.f32 %v255, %v284
    %v316 = vmul.f32 %v259, %v284
    %v317 = vmul.f32 %v247, %v288
    %v318 = vmul.f32 %v251, %v288
    %v319 = vmul.f32 %v255, %v288
    %v320 = vmul.f32 %v259, %v288
    %v321 = vmul.f32 %v247, %v292
    %v322 = vmul.f32 %v251, %v292
    %v323 = vmul.f32 %v255, %v292
    %v324 = vmul.f32 %v259, %v292
    %v325 = vadd.f32 %v213, %v293
    %v326 = vadd.f32 %v214, %v294
    %v327 = vadd.f32 %v215, %v295
    %v328 = vadd.f32 %v216, %v296
    %v329 = vadd.f32 %v217, %v297
    %v330 = vadd.f32 %v218, %v298
    %v331 = vadd.f32 %v219, %v299
    %v332 = vadd.f32 %v220, %v300
    %v333 = vadd.f32 %v221, %v301
    %v334 = vadd.f32 %v222, %v302
    %v335 = vadd.f32 %v223, %v303
    %v336 = vadd.f32 %v224, %v304
    %v337 = vadd.f32 %v225, %v305
    %v338 = vadd.f32 %v226, %v306
    %v339 = vadd.f32 %v227, %v307
    %v340 = vadd.f32 %v228, %v308
    %v341 = vadd.f32 %v229, %v309
    %v342 = vadd.f32 %v230, %v310
    %v343 = vadd.f32 %v231, %v311
    %v344 = vadd.f32 %v232, %v312
    %v345 = vadd.f32 %v233, %v313
    %v346 = vadd.f32 %v234, %v314
    %v347 = vadd.f32 %v235, %v315
    %v348 = vadd.f32 %v236, %v316
    %v349 = vadd.f32 %v237, %v317
    %v350 = vadd.f32 %v238, %v318
    %v351 = vadd.f32 %v239, %v319
    %v352 = vadd.f32 %v240, %v320
    %v353 = vadd.f32 %v241, %v321
    %v354 = vadd.f32 %v242, %v322
    %v355 = vadd.f32 %v243, %v323
    %v356 = vadd.f32 %v244, %v324
    %v357 = vpack.c.bf16 %v326, %v325
    %v358 = vpack.c.bf16 %v328, %v327
    %v359 = vpack.c.bf16 %v330, %v329
    %v360 = vpack.c.bf16 %v332, %v331
    %v361 = vpack.c.bf16 %v334, %v333
    %v362 = vpack.c.bf16 %v336, %v335
    %v363 = vpack.c.bf16 %v338, %v337
    %v364 = vpack.c.bf16 %v340, %v339
    %v365 = vpack.c.bf16 %v342, %v341
    %v366 = vpack.c.bf16 %v344, %v343
    %v367 = vpack.c.bf16 %v346, %v345
    %v368 = vpack.c.bf16 %v348, %v347
    %v369 = vpack.c.bf16 %v350, %v349
    %v370 = vpack.c.bf16 %v352, %v351
    %v371 = vpack.c.bf16 %v354, %v353
    %v372 = vpack.c.bf16 %v356, %v355
    %v373 = vld [vmem:[%s4] sm:$0xff]
    %v374 = vld [vmem:[%s4 + $0x8] sm:$0xff]
    %v375 = vld [vmem:[%s4 + $0x10] sm:$0xff]
    %v376 = vld [vmem:[%s4 + $0x18] sm:$0xff]
    %378 = vset.pattern.permute.xlu0 0
    %379 = vperm.xlu0 %378, %v373
    %v380 = vpop.permute.xlu0 %379
    %383 = vset.pattern.permute.xlu0 0
    %384 = vperm.xlu0 %383, %v374
    %v385 = vpop.permute.xlu0 %384
    %388 = vset.pattern.permute.xlu0 0
    %389 = vperm.xlu0 %388, %v375
    %v390 = vpop.permute.xlu0 %389
    %393 = vset.pattern.permute.xlu0 0
    %394 = vperm.xlu0 %393, %v376
    %v395 = vpop.permute.xlu0 %394
    %v409 = vunpack.c.l.b16 %v53
    %v410 = vunpack.c.l.b16 %v54
    %v411 = vunpack.c.l.b16 %v55
    %v412 = vunpack.c.l.b16 %v56
    %v413 = vunpack.c.l.b16 %v57
    %v414 = vunpack.c.l.b16 %v58
    %v415 = vunpack.c.l.b16 %v59
    %v416 = vunpack.c.l.b16 %v60
    %v417 = vunpack.c.l.b16 %v61
    %v418 = vunpack.c.l.b16 %v62
    %v419 = vunpack.c.l.b16 %v63
    %v420 = vunpack.c.l.b16 %v64
    %v421 = vpack.c.b16 %v410, %v409
    %v422 = vpack.c.b16 %v412, %v411
    %v423 = vpack.c.b16 %v414, %v413
    %v424 = vpack.c.b16 %v416, %v415
    %v425 = vpack.c.b16 %v418, %v417
    %v426 = vpack.c.b16 %v420, %v419
    %vm432 = vcmask 736256
    %v434 = vsel %vm432, %v357, 0
    %v437 = vsel %vm432, %v358, 0
    %vm439 = vcmask 1044480
    %v441 = vsel %vm439, %v426, 0
    %443 = vmatprep.subr.bf16.mxu0 0
    %444 = vmatpush1.bf16.msra.mxu0 %v421
    %445 = vmatprep.subr.bf16.mxu0 0
    %446 = vmatpush1.bf16.msra.mxu0 %v422
    %447 = vmatprep.subr.bf16.mxu0 0
    %448 = vmatpush1.bf16.msra.mxu0 %v423
    %449 = vmatprep.subr.bf16.mxu0 0
    %450 = vmatpush1.bf16.msra.mxu0 %v424
    %451 = vmatprep.subr.bf16.mxu0 0
    %452 = vmatpush1.bf16.msra.mxu0 %v425
    %453 = vmatprep.subr.bf16.mxu0 0
    %454 = vmatpush1.bf16.msra.mxu0 %v441
    %455 = vmatprep.subr.bf16.mxu0 0
    %456 = vmatpush1.bf16.msra.mxu0 0
    %457 = vmatprep.subr.bf16.mxu0 0
    %458 = vmatpush1.bf16.msra.mxu0 0
    %459 = vmatprep.subr.bf16.mxu0 0
    %460 = vmatpush1.bf16.msra.mxu0 0
    %461 = vmatprep.subr.bf16.mxu0 0
    %462 = vmatpush1.bf16.msra.mxu0 0
    %463 = vmatprep.subr.bf16.mxu0 0
    %464 = vmatpush1.bf16.msra.mxu0 0
    %465 = vmatprep.subr.bf16.mxu0 0
    %466 = vmatpush1.bf16.msra.mxu0 0
    %467 = vmatprep.subr.bf16.mxu0 0
    %468 = vmatpush1.bf16.msra.mxu0 0
    %469 = vmatprep.subr.bf16.mxu0 0
    %470 = vmatpush1.bf16.msra.mxu0 0
    %471 = vmatprep.subr.bf16.mxu0 0
    %472 = vmatpush1.bf16.msra.mxu0 0
    %473 = vmatprep.subr.bf16.mxu0 0
    %474 = vmatpush1.bf16.msra.mxu0 0
    %475 = vmatprep.mubr.bf16.mxu0 0
    %476 = vmatmul.mubr.bf16.gmra.mrb[0].mxu0 %v434
    %v477 = vpop.f32.mrb[0].mxu0
    %v478 = vadd.f32 %v380, %v477
    %v479 = vpop.f32.mrb[0].mxu0
    %v480 = vpop.f32.mrb[0].mxu0
    %v481 = vadd.f32 %v385, %v480
    %v482 = vpop.f32.mrb[0].mxu0
    %483 = vmatprep.mubr.bf16.mxu0 0
    %484 = vmatmul.mubr.bf16.gmra.mrb[0].mxu0 %v437
    %v485 = vpop.f32.mrb[0].mxu0
    %v486 = vadd.f32 %v390, %v485
    %v487 = vpop.f32.mrb[0].mxu0
    %v488 = vpop.f32.mrb[0].mxu0
    %v489 = vadd.f32 %v395, %v488
    %v490 = vpop.f32.mrb[0].mxu0
    %491 = vdwg.mxu0
    %v504 = vunpack.c.l.b16 %v65
    %v505 = vunpack.c.l.b16 %v66
    %v506 = vunpack.c.l.b16 %v67
    %v507 = vunpack.c.l.b16 %v68
    %v508 = vunpack.c.l.b16 %v69
    %v509 = vunpack.c.l.b16 %v70
    %v510 = vunpack.c.l.b16 %v71
    %v511 = vunpack.c.l.b16 %v72
    %v512 = vunpack.c.l.b16 %v73
    %v513 = vunpack.c.l.b16 %v74
    %v514 = vunpack.c.l.b16 %v75
    %v515 = vunpack.c.l.b16 %v76
    %v516 = vpack.c.b16 %v505, %v504
    %v517 = vpack.c.b16 %v507, %v506
    %v518 = vpack.c.b16 %v509, %v508
    %v519 = vpack.c.b16 %v511, %v510
    %v520 = vpack.c.b16 %v513, %v512
    %v521 = vpack.c.b16 %v515, %v514
    %v528 = vsel %vm432, %v359, 0
    %v531 = vsel %vm432, %v360, 0
    %v534 = vsel %vm439, %v521, 0
    %536 = vmatprep.subr.bf16.mxu0 0
    %537 = vmatpush1.bf16.msra.mxu0 %v516
    %538 = vmatprep.subr.bf16.mxu0 0
    %539 = vmatpush1.bf16.msra.mxu0 %v517
    %540 = vmatprep.subr.bf16.mxu0 0
    %541 = vmatpush1.bf16.msra.mxu0 %v518
    %542 = vmatprep.subr.bf16.mxu0 0
    %543 = vmatpush1.bf16.msra.mxu0 %v519
    %544 = vmatprep.subr.bf16.mxu0 0
    %545 = vmatpush1.bf16.msra.mxu0 %v520
    %546 = vmatprep.subr.bf16.mxu0 0
    %547 = vmatpush1.bf16.msra.mxu0 %v534
    %548 = vmatprep.subr.bf16.mxu0 0
    %549 = vmatpush1.bf16.msra.mxu0 0
    %550 = vmatprep.subr.bf16.mxu0 0
    %551 = vmatpush1.bf16.msra.mxu0 0
    %552 = vmatprep.subr.bf16.mxu0 0
    %553 = vmatpush1.bf16.msra.mxu0 0
    %554 = vmatprep.subr.bf16.mxu0 0
    %555 = vmatpush1.bf16.msra.mxu0 0
    %556 = vmatprep.subr.bf16.mxu0 0
    %557 = vmatpush1.bf16.msra.mxu0 0
    %558 = vmatprep.subr.bf16.mxu0 0
    %559 = vmatpush1.bf16.msra.mxu0 0
    %560 = vmatprep.subr.bf16.mxu0 0
    %561 = vmatpush1.bf16.msra.mxu0 0
    %562 = vmatprep.subr.bf16.mxu0 0
    %563 = vmatpush1.bf16.msra.mxu0 0
    %564 = vmatprep.subr.bf16.mxu0 0
    %565 = vmatpush1.bf16.msra.mxu0 0
    %566 = vmatprep.subr.bf16.mxu0 0
    %567 = vmatpush1.bf16.msra.mxu0 0
    %568 = vmatprep.mubr.bf16.mxu0 0
    %569 = vmatmul.mubr.bf16.gmra.mrb[0].mxu0 %v528
    %v570 = vpop.f32.mrb[0].mxu0
    %v571 = vadd.f32 %v380, %v570
    %v572 = vpop.f32.mrb[0].mxu0
    %v573 = vpop.f32.mrb[0].mxu0
    %v574 = vadd.f32 %v385, %v573
    %v575 = vpop.f32.mrb[0].mxu0
    %576 = vmatprep.mubr.bf16.mxu0 0
    %577 = vmatmul.mubr.bf16.gmra.mrb[0].mxu0 %v531
    %v578 = vpop.f32.mrb[0].mxu0
    %v579 = vadd.f32 %v390, %v578
    %v580 = vpop.f32.mrb[0].mxu0
    %v581 = vpop.f32.mrb[0].mxu0
    %v582 = vadd.f32 %v395, %v581
    %v583 = vpop.f32.mrb[0].mxu0
    %584 = vdwg.mxu0
    %v597 = vunpack.c.l.b16 %v77
    %v598 = vunpack.c.l.b16 %v78
    %v599 = vunpack.c.l.b16 %v79
    %v600 = vunpack.c.l.b16 %v80
    %v601 = vunpack.c.l.b16 %v81
    %v602 = vunpack.c.l.b16 %v82
    %v603 = vunpack.c.l.b16 %v83
    %v604 = vunpack.c.l.b16 %v84
    %v605 = vunpack.c.l.b16 %v85
    %v606 = vunpack.c.l.b16 %v86
    %v607 = vunpack.c.l.b16 %v87
    %v608 = vunpack.c.l.b16 %v88
    %v609 = vpack.c.b16 %v598, %v597
    %v610 = vpack.c.b16 %v600, %v599
    %v611 = vpack.c.b16 %v602, %v601
    %v612 = vpack.c.b16 %v604, %v603
    %v613 = vpack.c.b16 %v606, %v605
    %v614 = vpack.c.b16 %v608, %v607
    %v621 = vsel %vm432, %v361, 0
    %v624 = vsel %vm432, %v362, 0
    %v627 = vsel %vm439, %v614, 0
    %629 = vmatprep.subr.bf16.mxu0 0
    %630 = vmatpush1.bf16.msra.mxu0 %v609
    %631 = vmatprep.subr.bf16.mxu0 0
    %632 = vmatpush1.bf16.msra.mxu0 %v610
    %633 = vmatprep.subr.bf16.mxu0 0
    %634 = vmatpush1.bf16.msra.mxu0 %v611
    %635 = vmatprep.subr.bf16.mxu0 0
    %636 = vmatpush1.bf16.msra.mxu0 %v612
    %637 = vmatprep.subr.bf16.mxu0 0
    %638 = vmatpush1.bf16.msra.mxu0 %v613
    %639 = vmatprep.subr.bf16.mxu0 0
    %640 = vmatpush1.bf16.msra.mxu0 %v627
    %641 = vmatprep.subr.bf16.mxu0 0
    %642 = vmatpush1.bf16.msra.mxu0 0
    %643 = vmatprep.subr.bf16.mxu0 0
    %644 = vmatpush1.bf16.msra.mxu0 0
    %645 = vmatprep.subr.bf16.mxu0 0
    %646 = vmatpush1.bf16.msra.mxu0 0
    %647 = vmatprep.subr.bf16.mxu0 0
    %648 = vmatpush1.bf16.msra.mxu0 0
    %649 = vmatprep.subr.bf16.mxu0 0
    %650 = vmatpush1.bf16.msra.mxu0 0
    %651 = vmatprep.subr.bf16.mxu0 0
    %652 = vmatpush1.bf16.msra.mxu0 0
    %653 = vmatprep.subr.bf16.mxu0 0
    %654 = vmatpush1.bf16.msra.mxu0 0
    %655 = vmatprep.subr.bf16.mxu0 0
    %656 = vmatpush1.bf16.msra.mxu0 0
    %657 = vmatprep.subr.bf16.mxu0 0
    %658 = vmatpush1.bf16.msra.mxu0 0
    %659 = vmatprep.subr.bf16.mxu0 0
    %660 = vmatpush1.bf16.msra.mxu0 0
    %661 = vmatprep.mubr.bf16.mxu0 0
    %662 = vmatmul.mubr.bf16.gmra.mrb[0].mxu0 %v621
    %v663 = vpop.f32.mrb[0].mxu0
    %v664 = vadd.f32 %v380, %v663
    %v665 = vpop.f32.mrb[0].mxu0
    %v666 = vpop.f32.mrb[0].mxu0
    %v667 = vadd.f32 %v385, %v666
    %v668 = vpop.f32.mrb[0].mxu0
    %669 = vmatprep.mubr.bf16.mxu0 0
    %670 = vmatmul.mubr.bf16.gmra.mrb[0].mxu0 %v624
    %v671 = vpop.f32.mrb[0].mxu0
    %v672 = vadd.f32 %v390, %v671
    %v673 = vpop.f32.mrb[0].mxu0
    %v674 = vpop.f32.mrb[0].mxu0
    %v675 = vadd.f32 %v395, %v674
    %v676 = vpop.f32.mrb[0].mxu0
    %677 = vdwg.mxu0
    %v690 = vunpack.c.l.b16 %v89
    %v691 = vunpack.c.l.b16 %v90
    %v692 = vunpack.c.l.b16 %v91
    %v693 = vunpack.c.l.b16 %v92
    %v694 = vunpack.c.l.b16 %v93
    %v695 = vunpack.c.l.b16 %v94
    %v696 = vunpack.c.l.b16 %v95
    %v697 = vunpack.c.l.b16 %v96
    %v698 = vunpack.c.l.b16 %v97
    %v699 = vunpack.c.l.b16 %v98
    %v700 = vunpack.c.l.b16 %v99
    %v701 = vunpack.c.l.b16 %v100
    %v702 = vpack.c.b16 %v691, %v690
    %v703 = vpack.c.b16 %v693, %v692
    %v704 = vpack.c.b16 %v695, %v694
    %v705 = vpack.c.b16 %v697, %v696
    %v706 = vpack.c.b16 %v699, %v698
    %v707 = vpack.c.b16 %v701, %v700
    %v714 = vsel %vm432, %v363, 0
    %v717 = vsel %vm432, %v364, 0
    %v720 = vsel %vm439, %v707, 0
    %722 = vmatprep.subr.bf16.mxu0 0
    %723 = vmatpush1.bf16.msra.mxu0 %v702
    %724 = vmatprep.subr.bf16.mxu0 0
    %725 = vmatpush1.bf16.msra.mxu0 %v703
    %726 = vmatprep.subr.bf16.mxu0 0
    %727 = vmatpush1.bf16.msra.mxu0 %v704
    %728 = vmatprep.subr.bf16.mxu0 0
    %729 = vmatpush1.bf16.msra.mxu0 %v705
    %730 = vmatprep.subr.bf16.mxu0 0
    %731 = vmatpush1.bf16.msra.mxu0 %v706
    %732 = vmatprep.subr.bf16.mxu0 0
    %733 = vmatpush1.bf16.msra.mxu0 %v720
    %734 = vmatprep.subr.bf16.mxu0 0
    %735 = vmatpush1.bf16.msra.mxu0 0
    %736 = vmatprep.subr.bf16.mxu0 0
    %737 = vmatpush1.bf16.msra.mxu0 0
    %738 = vmatprep.subr.bf16.mxu0 0
    %739 = vmatpush1.bf16.msra.mxu0 0
    %740 = vmatprep.subr.bf16.mxu0 0
    %741 = vmatpush1.bf16.msra.mxu0 0
    %742 = vmatprep.subr.bf16.mxu0 0
    %743 = vmatpush1.bf16.msra.mxu0 0
    %744 = vmatprep.subr.bf16.mxu0 0
    %745 = vmatpush1.bf16.msra.mxu0 0
    %746 = vmatprep.subr.bf16.mxu0 0
    %747 = vmatpush1.bf16.msra.mxu0 0
    %748 = vmatprep.subr.bf16.mxu0 0
    %749 = vmatpush1.bf16.msra.mxu0 0
    %750 = vmatprep.subr.bf16.mxu0 0
    %751 = vmatpush1.bf16.msra.mxu0 0
    %752 = vmatprep.subr.bf16.mxu0 0
    %753 = vmatpush1.bf16.msra.mxu0 0
    %754 = vmatprep.mubr.bf16.mxu0 0
    %755 = vmatmul.mubr.bf16.gmra.mrb[0].mxu0 %v714
    %v756 = vpop.f32.mrb[0].mxu0
    %v757 = vadd.f32 %v380, %v756
    %v758 = vpop.f32.mrb[0].mxu0
    %v759 = vpop.f32.mrb[0].mxu0
    %v760 = vadd.f32 %v385, %v759
    %v761 = vpop.f32.mrb[0].mxu0
    %762 = vmatprep.mubr.bf16.mxu0 0
    %763 = vmatmul.mubr.bf16.gmra.mrb[0].mxu0 %v717
    %v764 = vpop.f32.mrb[0].mxu0
    %v765 = vadd.f32 %v390, %v764
    %v766 = vpop.f32.mrb[0].mxu0
    %v767 = vpop.f32.mrb[0].mxu0
    %v768 = vadd.f32 %v395, %v767
    %v769 = vpop.f32.mrb[0].mxu0
    %770 = vdwg.mxu0
    %v783 = vunpack.c.l.b16 %v101
    %v784 = vunpack.c.l.b16 %v102
    %v785 = vunpack.c.l.b16 %v103
    %v786 = vunpack.c.l.b16 %v104
    %v787 = vunpack.c.l.b16 %v105
    %v788 = vunpack.c.l.b16 %v106
    %v789 = vunpack.c.l.b16 %v107
    %v790 = vunpack.c.l.b16 %v108
    %v791 = vunpack.c.l.b16 %v109
    %v792 = vunpack.c.l.b16 %v110
    %v793 = vunpack.c.l.b16 %v111
    %v794 = vunpack.c.l.b16 %v112
    %v795 = vpack.c.b16 %v784, %v783
    %v796 = vpack.c.b16 %v786, %v785
    %v797 = vpack.c.b16 %v788, %v787
    %v798 = vpack.c.b16 %v790, %v789
    %v799 = vpack.c.b16 %v792, %v791
    %v800 = vpack.c.b16 %v794, %v793
    %v807 = vsel %vm432, %v365, 0
    %v810 = vsel %vm432, %v366, 0
    %v813 = vsel %vm439, %v800, 0
    %815 = vmatprep.subr.bf16.mxu0 0
    %816 = vmatpush1.bf16.msra.mxu0 %v795
    %817 = vmatprep.subr.bf16.mxu0 0
    %818 = vmatpush1.bf16.msra.mxu0 %v796
    %819 = vmatprep.subr.bf16.mxu0 0
    %820 = vmatpush1.bf16.msra.mxu0 %v797
    %821 = vmatprep.subr.bf16.mxu0 0
    %822 = vmatpush1.bf16.msra.mxu0 %v798
    %823 = vmatprep.subr.bf16.mxu0 0
    %824 = vmatpush1.bf16.msra.mxu0 %v799
    %825 = vmatprep.subr.bf16.mxu0 0
    %826 = vmatpush1.bf16.msra.mxu0 %v813
    %827 = vmatprep.subr.bf16.mxu0 0
    %828 = vmatpush1.bf16.msra.mxu0 0
    %829 = vmatprep.subr.bf16.mxu0 0
    %830 = vmatpush1.bf16.msra.mxu0 0
    %831 = vmatprep.subr.bf16.mxu0 0
    %832 = vmatpush1.bf16.msra.mxu0 0
    %833 = vmatprep.subr.bf16.mxu0 0
    %834 = vmatpush1.bf16.msra.mxu0 0
    %835 = vmatprep.subr.bf16.mxu0 0
    %836 = vmatpush1.bf16.msra.mxu0 0
    %837 = vmatprep.subr.bf16.mxu0 0
    %838 = vmatpush1.bf16.msra.mxu0 0
    %839 = vmatprep.subr.bf16.mxu0 0
    %840 = vmatpush1.bf16.msra.mxu0 0
    %841 = vmatprep.subr.bf16.mxu0 0
    %842 = vmatpush1.bf16.msra.mxu0 0
    %843 = vmatprep.subr.bf16.mxu0 0
    %844 = vmatpush1.bf16.msra.mxu0 0
    %845 = vmatprep.subr.bf16.mxu0 0
    %846 = vmatpush1.bf16.msra.mxu0 0
    %847 = vmatprep.mubr.bf16.mxu0 0
    %848 = vmatmul.mubr.bf16.gmra.mrb[0].mxu0 %v807
    %v849 = vpop.f32.mrb[0].mxu0
    %v850 = vadd.f32 %v380, %v849
    %v851 = vpop.f32.mrb[0].mxu0
    %v852 = vpop.f32.mrb[0].mxu0
    %v853 = vadd.f32 %v385, %v852
    %v854 = vpop.f32.mrb[0].mxu0
    %855 = vmatprep.mubr.bf16.mxu0 0
    %856 = vmatmul.mubr.bf16.gmra.mrb[0].mxu0 %v810
    %v857 = vpop.f32.mrb[0].mxu0
    %v858 = vadd.f32 %v390, %v857
    %v859 = vpop.f32.mrb[0].mxu0
    %v860 = vpop.f32.mrb[0].mxu0
    %v861 = vadd.f32 %v395, %v860
    %v862 = vpop.f32.mrb[0].mxu0
    %863 = vdwg.mxu0
    %v876 = vunpack.c.l.b16 %v113
    %v877 = vunpack.c.l.b16 %v114
    %v878 = vunpack.c.l.b16 %v115
    %v879 = vunpack.c.l.b16 %v116
    %v880 = vunpack.c.l.b16 %v117
    %v881 = vunpack.c.l.b16 %v118
    %v882 = vunpack.c.l.b16 %v119
    %v883 = vunpack.c.l.b16 %v120
    %v884 = vunpack.c.l.b16 %v121
    %v885 = vunpack.c.l.b16 %v122
    %v886 = vunpack.c.l.b16 %v123
    %v887 = vunpack.c.l.b16 %v124
    %v888 = vpack.c.b16 %v877, %v876
    %v889 = vpack.c.b16 %v879, %v878
    %v890 = vpack.c.b16 %v881, %v880
    %v891 = vpack.c.b16 %v883, %v882
    %v892 = vpack.c.b16 %v885, %v884
    %v893 = vpack.c.b16 %v887, %v886
    %v900 = vsel %vm432, %v367, 0
    %v903 = vsel %vm432, %v368, 0
    %v906 = vsel %vm439, %v893, 0
    %908 = vmatprep.subr.bf16.mxu0 0
    %909 = vmatpush1.bf16.msra.mxu0 %v888
    %910 = vmatprep.subr.bf16.mxu0 0
    %911 = vmatpush1.bf16.msra.mxu0 %v889
    %912 = vmatprep.subr.bf16.mxu0 0
    %913 = vmatpush1.bf16.msra.mxu0 %v890
    %914 = vmatprep.subr.bf16.mxu0 0
    %915 = vmatpush1.bf16.msra.mxu0 %v891
    %916 = vmatprep.subr.bf16.mxu0 0
    %917 = vmatpush1.bf16.msra.mxu0 %v892
    %918 = vmatprep.subr.bf16.mxu0 0
    %919 = vmatpush1.bf16.msra.mxu0 %v906
    %920 = vmatprep.subr.bf16.mxu0 0
    %921 = vmatpush1.bf16.msra.mxu0 0
    %922 = vmatprep.subr.bf16.mxu0 0
    %923 = vmatpush1.bf16.msra.mxu0 0
    %924 = vmatprep.subr.bf16.mxu0 0
    %925 = vmatpush1.bf16.msra.mxu0 0
    %926 = vmatprep.subr.bf16.mxu0 0
    %927 = vmatpush1.bf16.msra.mxu0 0
    %928 = vmatprep.subr.bf16.mxu0 0
    %929 = vmatpush1.bf16.msra.mxu0 0
    %930 = vmatprep.subr.bf16.mxu0 0
    %931 = vmatpush1.bf16.msra.mxu0 0
    %932 = vmatprep.subr.bf16.mxu0 0
    %933 = vmatpush1.bf16.msra.mxu0 0
    %934 = vmatprep.subr.bf16.mxu0 0
    %935 = vmatpush1.bf16.msra.mxu0 0
    %936 = vmatprep.subr.bf16.mxu0 0
    %937 = vmatpush1.bf16.msra.mxu0 0
    %938 = vmatprep.subr.bf16.mxu0 0
    %939 = vmatpush1.bf16.msra.mxu0 0
    %940 = vmatprep.mubr.bf16.mxu0 0
    %941 = vmatmul.mubr.bf16.gmra.mrb[0].mxu0 %v900
    %v942 = vpop.f32.mrb[0].mxu0
    %v943 = vadd.f32 %v380, %v942
    %v944 = vpop.f32.mrb[0].mxu0
    %v945 = vpop.f32.mrb[0].mxu0
    %v946 = vadd.f32 %v385, %v945
    %v947 = vpop.f32.mrb[0].mxu0
    %948 = vmatprep.mubr.bf16.mxu0 0
    %949 = vmatmul.mubr.bf16.gmra.mrb[0].mxu0 %v903
    %v950 = vpop.f32.mrb[0].mxu0
    %v951 = vadd.f32 %v390, %v950
    %v952 = vpop.f32.mrb[0].mxu0
    %v953 = vpop.f32.mrb[0].mxu0
    %v954 = vadd.f32 %v395, %v953
    %v955 = vpop.f32.mrb[0].mxu0
    %956 = vdwg.mxu0
    %v969 = vunpack.c.l.b16 %v125
    %v970 = vunpack.c.l.b16 %v126
    %v971 = vunpack.c.l.b16 %v127
    %v972 = vunpack.c.l.b16 %v128
    %v973 = vunpack.c.l.b16 %v129
    %v974 = vunpack.c.l.b16 %v130
    %v975 = vunpack.c.l.b16 %v131
    %v976 = vunpack.c.l.b16 %v132
    %v977 = vunpack.c.l.b16 %v133
    %v978 = vunpack.c.l.b16 %v134
    %v979 = vunpack.c.l.b16 %v135
    %v980 = vunpack.c.l.b16 %v136
    %v981 = vpack.c.b16 %v970, %v969
    %v982 = vpack.c.b16 %v972, %v971
    %v983 = vpack.c.b16 %v974, %v973
    %v984 = vpack.c.b16 %v976, %v975
    %v985 = vpack.c.b16 %v978, %v977
    %v986 = vpack.c.b16 %v980, %v979
    %v993 = vsel %vm432, %v369, 0
    %v996 = vsel %vm432, %v370, 0
    %v999 = vsel %vm439, %v986, 0
    %1001 = vmatprep.subr.bf16.mxu0 0
    %1002 = vmatpush1.bf16.msra.mxu0 %v981
    %1003 = vmatprep.subr.bf16.mxu0 0
    %1004 = vmatpush1.bf16.msra.mxu0 %v982
    %1005 = vmatprep.subr.bf16.mxu0 0
    %1006 = vmatpush1.bf16.msra.mxu0 %v983
    %1007 = vmatprep.subr.bf16.mxu0 0
    %1008 = vmatpush1.bf16.msra.mxu0 %v984
    %1009 = vmatprep.subr.bf16.mxu0 0
    %1010 = vmatpush1.bf16.msra.mxu0 %v985
    %1011 = vmatprep.subr.bf16.mxu0 0
    %1012 = vmatpush1.bf16.msra.mxu0 %v999
    %1013 = vmatprep.subr.bf16.mxu0 0
    %1014 = vmatpush1.bf16.msra.mxu0 0
    %1015 = vmatprep.subr.bf16.mxu0 0
    %1016 = vmatpush1.bf16.msra.mxu0 0
    %1017 = vmatprep.subr.bf16.mxu0 0
    %1018 = vmatpush1.bf16.msra.mxu0 0
    %1019 = vmatprep.subr.bf16.mxu0 0
    %1020 = vmatpush1.bf16.msra.mxu0 0
    %1021 = vmatprep.subr.bf16.mxu0 0
    %1022 = vmatpush1.bf16.msra.mxu0 0
    %1023 = vmatprep.subr.bf16.mxu0 0
    %1024 = vmatpush1.bf16.msra.mxu0 0
    %1025 = vmatprep.subr.bf16.mxu0 0
    %1026 = vmatpush1.bf16.msra.mxu0 0
    %1027 = vmatprep.subr.bf16.mxu0 0
    %1028 = vmatpush1.bf16.msra.mxu0 0
    %1029 = vmatprep.subr.bf16.mxu0 0
    %1030 = vmatpush1.bf16.msra.mxu0 0
    %1031 = vmatprep.subr.bf16.mxu0 0
    %1032 = vmatpush1.bf16.msra.mxu0 0
    %1033 = vmatprep.mubr.bf16.mxu0 0
    %1034 = vmatmul.mubr.bf16.gmra.mrb[0].mxu0 %v993
    %v1035 = vpop.f32.mrb[0].mxu0
    %v1036 = vadd.f32 %v380, %v1035
    %v1037 = vpop.f32.mrb[0].mxu0
    %v1038 = vpop.f32.mrb[0].mxu0
    %v1039 = vadd.f32 %v385, %v1038
    %v1040 = vpop.f32.mrb[0].mxu0
    %1041 = vmatprep.mubr.bf16.mxu0 0
    %1042 = vmatmul.mubr.bf16.gmra.mrb[0].mxu0 %v996
    %v1043 = vpop.f32.mrb[0].mxu0
    %v1044 = vadd.f32 %v390, %v1043
    %v1045 = vpop.f32.mrb[0].mxu0
    %v1046 = vpop.f32.mrb[0].mxu0
    %v1047 = vadd.f32 %v395, %v1046
    %v1048 = vpop.f32.mrb[0].mxu0
    %1049 = vdwg.mxu0
    %v1062 = vunpack.c.l.b16 %v137
    %v1063 = vunpack.c.l.b16 %v138
    %v1064 = vunpack.c.l.b16 %v139
    %v1065 = vunpack.c.l.b16 %v140
    %v1066 = vunpack.c.l.b16 %v141
    %v1067 = vunpack.c.l.b16 %v142
    %v1068 = vunpack.c.l.b16 %v143
    %v1069 = vunpack.c.l.b16 %v144
    %v1070 = vunpack.c.l.b16 %v145
    %v1071 = vunpack.c.l.b16 %v146
    %v1072 = vunpack.c.l.b16 %v147
    %v1073 = vunpack.c.l.b16 %v148
    %v1074 = vpack.c.b16 %v1063, %v1062
    %v1075 = vpack.c.b16 %v1065, %v1064
    %v1076 = vpack.c.b16 %v1067, %v1066
    %v1077 = vpack.c.b16 %v1069, %v1068
    %v1078 = vpack.c.b16 %v1071, %v1070
    %v1079 = vpack.c.b16 %v1073, %v1072
    %v1086 = vsel %vm432, %v371, 0
    %v1089 = vsel %vm432, %v372, 0
    %v1092 = vsel %vm439, %v1079, 0
    %1094 = vmatprep.subr.bf16.mxu0 0
    %1095 = vmatpush1.bf16.msra.mxu0 %v1074
    %1096 = vmatprep.subr.bf16.mxu0 0
    %1097 = vmatpush1.bf16.msra.mxu0 %v1075
    %1098 = vmatprep.subr.bf16.mxu0 0
    %1099 = vmatpush1.bf16.msra.mxu0 %v1076
    %1100 = vmatprep.subr.bf16.mxu0 0
    %1101 = vmatpush1.bf16.msra.mxu0 %v1077
    %1102 = vmatprep.subr.bf16.mxu0 0
    %1103 = vmatpush1.bf16.msra.mxu0 %v1078
    %1104 = vmatprep.subr.bf16.mxu0 0
    %1105 = vmatpush1.bf16.msra.mxu0 %v1092
    %1106 = vmatprep.subr.bf16.mxu0 0
    %1107 = vmatpush1.bf16.msra.mxu0 0
    %1108 = vmatprep.subr.bf16.mxu0 0
    %1109 = vmatpush1.bf16.msra.mxu0 0
    %1110 = vmatprep.subr.bf16.mxu0 0
    %1111 = vmatpush1.bf16.msra.mxu0 0
    %1112 = vmatprep.subr.bf16.mxu0 0
    %1113 = vmatpush1.bf16.msra.mxu0 0
    %1114 = vmatprep.subr.bf16.mxu0 0
    %1115 = vmatpush1.bf16.msra.mxu0 0
    %1116 = vmatprep.subr.bf16.mxu0 0
    %1117 = vmatpush1.bf16.msra.mxu0 0
    %1118 = vmatprep.subr.bf16.mxu0 0
    %1119 = vmatpush1.bf16.msra.mxu0 0
    %1120 = vmatprep.subr.bf16.mxu0 0
    %1121 = vmatpush1.bf16.msra.mxu0 0
    %1122 = vmatprep.subr.bf16.mxu0 0
    %1123 = vmatpush1.bf16.msra.mxu0 0
    %1124 = vmatprep.subr.bf16.mxu0 0
    %1125 = vmatpush1.bf16.msra.mxu0 0
    %1126 = vmatprep.mubr.bf16.mxu0 0
    %1127 = vmatmul.mubr.bf16.gmra.mrb[0].mxu0 %v1086
    %v1128 = vpop.f32.mrb[0].mxu0
    %v1129 = vadd.f32 %v380, %v1128
    %v1130 = vpop.f32.mrb[0].mxu0
    %v1131 = vpop.f32.mrb[0].mxu0
    %v1132 = vadd.f32 %v385, %v1131
    %v1133 = vpop.f32.mrb[0].mxu0
    %1134 = vmatprep.mubr.bf16.mxu0 0
    %1135 = vmatmul.mubr.bf16.gmra.mrb[0].mxu0 %v1089
    %v1136 = vpop.f32.mrb[0].mxu0
    %v1137 = vadd.f32 %v390, %v1136
    %v1138 = vpop.f32.mrb[0].mxu0
    %v1139 = vpop.f32.mrb[0].mxu0
    %v1140 = vadd.f32 %v395, %v1139
    %v1141 = vpop.f32.mrb[0].mxu0
    %1142 = vdwg.mxu0
    %v1143 = vmax.f32 %v478, 0.0
    %v1144 = vmax.f32 %v481, 0.0
    %v1145 = vmax.f32 %v486, 0.0
    %v1146 = vmax.f32 %v489, 0.0
    %v1147 = vmax.f32 %v571, 0.0
    %v1148 = vmax.f32 %v574, 0.0
    %v1149 = vmax.f32 %v579, 0.0
    %v1150 = vmax.f32 %v582, 0.0
    %v1151 = vmax.f32 %v664, 0.0
    %v1152 = vmax.f32 %v667, 0.0
    %v1153 = vmax.f32 %v672, 0.0
    %v1154 = vmax.f32 %v675, 0.0
    %v1155 = vmax.f32 %v757, 0.0
    %v1156 = vmax.f32 %v760, 0.0
    %v1157 = vmax.f32 %v765, 0.0
    %v1158 = vmax.f32 %v768, 0.0
    %v1159 = vmax.f32 %v850, 0.0
    %v1160 = vmax.f32 %v853, 0.0
    %v1161 = vmax.f32 %v858, 0.0
    %v1162 = vmax.f32 %v861, 0.0
    %v1163 = vmax.f32 %v943, 0.0
    %v1164 = vmax.f32 %v946, 0.0
    %v1165 = vmax.f32 %v951, 0.0
    %v1166 = vmax.f32 %v954, 0.0
    %v1167 = vmax.f32 %v1036, 0.0
    %v1168 = vmax.f32 %v1039, 0.0
    %v1169 = vmax.f32 %v1044, 0.0
    %v1170 = vmax.f32 %v1047, 0.0
    %v1171 = vmax.f32 %v1129, 0.0
    %v1172 = vmax.f32 %v1132, 0.0
    %v1173 = vmax.f32 %v1137, 0.0
    %v1174 = vmax.f32 %v1140, 0.0
    %v1175 = vsel %vm432, %v1143, 0.0
    %1176 = vadd.xlane.f32.xlu0 %v1175
    %v1177 = vpop.xlane.xlu0 %1176
    %v1178 = vsel %vm432, %v1144, 0.0
    %1179 = vadd.xlane.f32.xlu0 %v1178
    %v1180 = vpop.xlane.xlu0 %1179
    %v1181 = vsel %vm432, %v1145, 0.0
    %1182 = vadd.xlane.f32.xlu0 %v1181
    %v1183 = vpop.xlane.xlu0 %1182
    %v1184 = vsel %vm432, %v1146, 0.0
    %1185 = vadd.xlane.f32.xlu0 %v1184
    %v1186 = vpop.xlane.xlu0 %1185
    %v1187 = vsel %vm432, %v1147, 0.0
    %1188 = vadd.xlane.f32.xlu0 %v1187
    %v1189 = vpop.xlane.xlu0 %1188
    %v1190 = vsel %vm432, %v1148, 0.0
    %1191 = vadd.xlane.f32.xlu0 %v1190
    %v1192 = vpop.xlane.xlu0 %1191
    %v1193 = vsel %vm432, %v1149, 0.0
    %1194 = vadd.xlane.f32.xlu0 %v1193
    %v1195 = vpop.xlane.xlu0 %1194
    %v1196 = vsel %vm432, %v1150, 0.0
    %1197 = vadd.xlane.f32.xlu0 %v1196
    %v1198 = vpop.xlane.xlu0 %1197
    %v1199 = vsel %vm432, %v1151, 0.0
    %1200 = vadd.xlane.f32.xlu0 %v1199
    %v1201 = vpop.xlane.xlu0 %1200
    %v1202 = vsel %vm432, %v1152, 0.0
    %1203 = vadd.xlane.f32.xlu0 %v1202
    %v1204 = vpop.xlane.xlu0 %1203
    %v1205 = vsel %vm432, %v1153, 0.0
    %1206 = vadd.xlane.f32.xlu0 %v1205
    %v1207 = vpop.xlane.xlu0 %1206
    %v1208 = vsel %vm432, %v1154, 0.0
    %1209 = vadd.xlane.f32.xlu0 %v1208
    %v1210 = vpop.xlane.xlu0 %1209
    %v1211 = vsel %vm432, %v1155, 0.0
    %1212 = vadd.xlane.f32.xlu0 %v1211
    %v1213 = vpop.xlane.xlu0 %1212
    %v1214 = vsel %vm432, %v1156, 0.0
    %1215 = vadd.xlane.f32.xlu0 %v1214
    %v1216 = vpop.xlane.xlu0 %1215
    %v1217 = vsel %vm432, %v1157, 0.0
    %1218 = vadd.xlane.f32.xlu0 %v1217
    %v1219 = vpop.xlane.xlu0 %1218
    %v1220 = vsel %vm432, %v1158, 0.0
    %1221 = vadd.xlane.f32.xlu0 %v1220
    %v1222 = vpop.xlane.xlu0 %1221
    %v1223 = vsel %vm432, %v1159, 0.0
    %1224 = vadd.xlane.f32.xlu0 %v1223
    %v1225 = vpop.xlane.xlu0 %1224
    %v1226 = vsel %vm432, %v1160, 0.0
    %1227 = vadd.xlane.f32.xlu0 %v1226
    %v1228 = vpop.xlane.xlu0 %1227
    %v1229 = vsel %vm432, %v1161, 0.0
    %1230 = vadd.xlane.f32.xlu0 %v1229
    %v1231 = vpop.xlane.xlu0 %1230
    %v1232 = vsel %vm432, %v1162, 0.0
    %1233 = vadd.xlane.f32.xlu0 %v1232
    %v1234 = vpop.xlane.xlu0 %1233
    %v1235 = vsel %vm432, %v1163, 0.0
    %1236 = vadd.xlane.f32.xlu0 %v1235
    %v1237 = vpop.xlane.xlu0 %1236
    %v1238 = vsel %vm432, %v1164, 0.0
    %1239 = vadd.xlane.f32.xlu0 %v1238
    %v1240 = vpop.xlane.xlu0 %1239
    %v1241 = vsel %vm432, %v1165, 0.0
    %1242 = vadd.xlane.f32.xlu0 %v1241
    %v1243 = vpop.xlane.xlu0 %1242
    %v1244 = vsel %vm432, %v1166, 0.0
    %1245 = vadd.xlane.f32.xlu0 %v1244
    %v1246 = vpop.xlane.xlu0 %1245
    %v1247 = vsel %vm432, %v1167, 0.0
    %1248 = vadd.xlane.f32.xlu0 %v1247
    %v1249 = vpop.xlane.xlu0 %1248
    %v1250 = vsel %vm432, %v1168, 0.0
    %1251 = vadd.xlane.f32.xlu0 %v1250
    %v1252 = vpop.xlane.xlu0 %1251
    %v1253 = vsel %vm432, %v1169, 0.0
    %1254 = vadd.xlane.f32.xlu0 %v1253
    %v1255 = vpop.xlane.xlu0 %1254
    %v1256 = vsel %vm432, %v1170, 0.0
    %1257 = vadd.xlane.f32.xlu0 %v1256
    %v1258 = vpop.xlane.xlu0 %1257
    %v1259 = vsel %vm432, %v1171, 0.0
    %1260 = vadd.xlane.f32.xlu0 %v1259
    %v1261 = vpop.xlane.xlu0 %1260
    %v1262 = vsel %vm432, %v1172, 0.0
    %1263 = vadd.xlane.f32.xlu0 %v1262
    %v1264 = vpop.xlane.xlu0 %1263
    %v1265 = vsel %vm432, %v1173, 0.0
    %1266 = vadd.xlane.f32.xlu0 %v1265
    %v1267 = vpop.xlane.xlu0 %1266
    %v1268 = vsel %vm432, %v1174, 0.0
    %1269 = vadd.xlane.f32.xlu0 %v1268
    %v1270 = vpop.xlane.xlu0 %1269
    %v1271 = vrcp.pop 90.0
    %v1272 = vmul.f32 %v1177, %v1271
    %v1273 = vmul.f32 %v1180, %v1271
    %v1274 = vmul.f32 %v1183, %v1271
    %v1275 = vmul.f32 %v1186, %v1271
    %v1276 = vmul.f32 %v1189, %v1271
    %v1277 = vmul.f32 %v1192, %v1271
    %v1278 = vmul.f32 %v1195, %v1271
    %v1279 = vmul.f32 %v1198, %v1271
    %v1280 = vmul.f32 %v1201, %v1271
    %v1281 = vmul.f32 %v1204, %v1271
    %v1282 = vmul.f32 %v1207, %v1271
    %v1283 = vmul.f32 %v1210, %v1271
    %v1284 = vmul.f32 %v1213, %v1271
    %v1285 = vmul.f32 %v1216, %v1271
    %v1286 = vmul.f32 %v1219, %v1271
    %v1287 = vmul.f32 %v1222, %v1271
    %v1288 = vmul.f32 %v1225, %v1271
    %v1289 = vmul.f32 %v1228, %v1271
    %v1290 = vmul.f32 %v1231, %v1271
    %v1291 = vmul.f32 %v1234, %v1271
    %v1292 = vmul.f32 %v1237, %v1271
    %v1293 = vmul.f32 %v1240, %v1271
    %v1294 = vmul.f32 %v1243, %v1271
    %v1295 = vmul.f32 %v1246, %v1271
    %v1296 = vmul.f32 %v1249, %v1271
    %v1297 = vmul.f32 %v1252, %v1271
    %v1298 = vmul.f32 %v1255, %v1271
    %v1299 = vmul.f32 %v1258, %v1271
    %v1300 = vmul.f32 %v1261, %v1271
    %v1301 = vmul.f32 %v1264, %v1271
    %v1302 = vmul.f32 %v1267, %v1271
    %v1303 = vmul.f32 %v1270, %v1271
    %v1304 = vpack.c.bf16 %v1273, %v1272
    %v1305 = vpack.c.bf16 %v1275, %v1274
    %v1306 = vpack.c.bf16 %v1277, %v1276
    %v1307 = vpack.c.bf16 %v1279, %v1278
    %v1308 = vpack.c.bf16 %v1281, %v1280
    %v1309 = vpack.c.bf16 %v1283, %v1282
    %v1310 = vpack.c.bf16 %v1285, %v1284
    %v1311 = vpack.c.bf16 %v1287, %v1286
    %v1312 = vpack.c.bf16 %v1289, %v1288
    %v1313 = vpack.c.bf16 %v1291, %v1290
    %v1314 = vpack.c.bf16 %v1293, %v1292
    %v1315 = vpack.c.bf16 %v1295, %v1294
    %v1316 = vpack.c.bf16 %v1297, %v1296
    %v1317 = vpack.c.bf16 %v1299, %v1298
    %v1318 = vpack.c.bf16 %v1301, %v1300
    %v1319 = vpack.c.bf16 %v1303, %v1302
    %v1320 = vld [vmem:[%s5] sm:$0xf]
    %v1321 = vld [vmem:[%s5 + $0x4] sm:$0xf]
    %v1322 = vld [vmem:[%s5 + $0x8] sm:$0xf]
    %v1323 = vld [vmem:[%s5 + $0xc] sm:$0xf]
    %v1324 = vld [vmem:[%s6] sm:$0x1]
    %v1326 = vlaneseq
    %v1327 = vshrl.u32 %v1326, 7
    %v1328 = vsub.s32 0, %v1327
    %v1329 = vrot.slane %v1324, %v1328
    %v1347 = vunpack.c.l.b16 %v1304
    %v1348 = vunpack.c.h.b16 %v1304
    %v1349 = vunpack.c.l.b16 %v1305
    %v1350 = vunpack.c.h.b16 %v1305
    %v1351 = vunpack.c.l.b16 %v1306
    %v1352 = vunpack.c.h.b16 %v1306
    %v1353 = vunpack.c.l.b16 %v1307
    %v1354 = vunpack.c.h.b16 %v1307
    %v1355 = vunpack.c.l.b16 %v1308
    %v1356 = vunpack.c.h.b16 %v1308
    %v1357 = vunpack.c.l.b16 %v1309
    %v1358 = vunpack.c.h.b16 %v1309
    %v1359 = vunpack.c.l.b16 %v1310
    %v1360 = vunpack.c.h.b16 %v1310
    %v1361 = vunpack.c.l.b16 %v1311
    %v1362 = vunpack.c.h.b16 %v1311
    %v1363 = vunpack.c.l.b16 %v1312
    %v1364 = vunpack.c.h.b16 %v1312
    %v1365 = vunpack.c.l.b16 %v1313
    %v1366 = vunpack.c.h.b16 %v1313
    %v1367 = vunpack.c.l.b16 %v1314
    %v1368 = vunpack.c.h.b16 %v1314
    %v1369 = vunpack.c.l.b16 %v1315
    %v1370 = vunpack.c.h.b16 %v1315
    %v1371 = vunpack.c.l.b16 %v1316
    %v1372 = vunpack.c.h.b16 %v1316
    %v1373 = vunpack.c.l.b16 %v1317
    %v1374 = vunpack.c.h.b16 %v1317
    %v1375 = vunpack.c.l.b16 %v1318
    %v1376 = vunpack.c.h.b16 %v1318
    %v1377 = vunpack.c.l.b16 %v1319
    %v1378 = vunpack.c.h.b16 %v1319
    %v1379 = vlaneseq
    %v1380 = vand.u32 %v1379, 127
    %v1381 = vlaneseq
    %v1382 = vshrl.u32 %v1381, 7
    %v1383 = vsub.s32 %v1380, %v1382
    %v1384 = vrot.slane %v1347, %v1383
    %v1385 = vadd.s32 %v1380, 4294967288
    %v1386 = vlaneseq
    %v1387 = vshrl.u32 %v1386, 7
    %v1388 = vsub.s32 %v1385, %v1387
    %v1389 = vrot.slane %v1348, %v1388
    %vm1390 = vcmask 130112
    %v1391 = vsel %vm1390, %v1389, %v1384
    %v1392 = vadd.s32 %v1380, 4294967280
    %v1393 = vlaneseq
    %v1394 = vshrl.u32 %v1393, 7
    %v1395 = vsub.s32 %v1392, %v1394
    %v1396 = vrot.slane %v1349, %v1395
    %vm1397 = vcmask 195712
    %v1398 = vsel %vm1397, %v1396, %v1391
    %v1399 = vadd.s32 %v1380, 4294967272
    %v1400 = vlaneseq
    %v1401 = vshrl.u32 %v1400, 7
    %v1402 = vsub.s32 %v1399, %v1401
    %v1403 = vrot.slane %v1350, %v1402
    %vm1404 = vcmask 261312
    %v1405 = vsel %vm1404, %v1403, %v1398
    %v1406 = vlaneseq
    %v1407 = vshrl.u32 %v1406, 7
    %v1408 = vsub.s32 %v1380, %v1407
    %v1409 = vrot.slane %v1351, %v1408
    %v1410 = vlaneseq
    %v1411 = vshrl.u32 %v1410, 7
    %v1412 = vsub.s32 %v1385, %v1411
    %v1413 = vrot.slane %v1352, %v1412
    %v1414 = vsel %vm1390, %v1413, %v1409
    %v1415 = vlaneseq
    %v1416 = vshrl.u32 %v1415, 7
    %v1417 = vsub.s32 %v1392, %v1416
    %v1418 = vrot.slane %v1353, %v1417
    %v1419 = vsel %vm1397, %v1418, %v1414
    %v1420 = vlaneseq
    %v1421 = vshrl.u32 %v1420, 7
    %v1422 = vsub.s32 %v1399, %v1421
    %v1423 = vrot.slane %v1354, %v1422
    %v1424 = vsel %vm1404, %v1423, %v1419
    %v1425 = vlaneseq
    %v1426 = vshrl.u32 %v1425, 7
    %v1427 = vsub.s32 %v1380, %v1426
    %v1428 = vrot.slane %v1355, %v1427
    %v1429 = vlaneseq
    %v1430 = vshrl.u32 %v1429, 7
    %v1431 = vsub.s32 %v1385, %v1430
    %v1432 = vrot.slane %v1356, %v1431
    %v1433 = vsel %vm1390, %v1432, %v1428
    %v1434 = vlaneseq
    %v1435 = vshrl.u32 %v1434, 7
    %v1436 = vsub.s32 %v1392, %v1435
    %v1437 = vrot.slane %v1357, %v1436
    %v1438 = vsel %vm1397, %v1437, %v1433
    %v1439 = vlaneseq
    %v1440 = vshrl.u32 %v1439, 7
    %v1441 = vsub.s32 %v1399, %v1440
    %v1442 = vrot.slane %v1358, %v1441
    %v1443 = vsel %vm1404, %v1442, %v1438
    %v1444 = vlaneseq
    %v1445 = vshrl.u32 %v1444, 7
    %v1446 = vsub.s32 %v1380, %v1445
    %v1447 = vrot.slane %v1359, %v1446
    %v1448 = vlaneseq
    %v1449 = vshrl.u32 %v1448, 7
    %v1450 = vsub.s32 %v1385, %v1449
    %v1451 = vrot.slane %v1360, %v1450
    %v1452 = vsel %vm1390, %v1451, %v1447
    %v1453 = vlaneseq
    %v1454 = vshrl.u32 %v1453, 7
    %v1455 = vsub.s32 %v1392, %v1454
    %v1456 = vrot.slane %v1361, %v1455
    %v1457 = vsel %vm1397, %v1456, %v1452
    %v1458 = vlaneseq
    %v1459 = vshrl.u32 %v1458, 7
    %v1460 = vsub.s32 %v1399, %v1459
    %v1461 = vrot.slane %v1362, %v1460
    %v1462 = vsel %vm1404, %v1461, %v1457
    %v1463 = vlaneseq
    %v1464 = vshrl.u32 %v1463, 7
    %v1465 = vsub.s32 %v1380, %v1464
    %v1466 = vrot.slane %v1363, %v1465
    %v1467 = vlaneseq
    %v1468 = vshrl.u32 %v1467, 7
    %v1469 = vsub.s32 %v1385, %v1468
    %v1470 = vrot.slane %v1364, %v1469
    %v1471 = vsel %vm1390, %v1470, %v1466
    %v1472 = vlaneseq
    %v1473 = vshrl.u32 %v1472, 7
    %v1474 = vsub.s32 %v1392, %v1473
    %v1475 = vrot.slane %v1365, %v1474
    %v1476 = vsel %vm1397, %v1475, %v1471
    %v1477 = vlaneseq
    %v1478 = vshrl.u32 %v1477, 7
    %v1479 = vsub.s32 %v1399, %v1478
    %v1480 = vrot.slane %v1366, %v1479
    %v1481 = vsel %vm1404, %v1480, %v1476
    %v1482 = vlaneseq
    %v1483 = vshrl.u32 %v1482, 7
    %v1484 = vsub.s32 %v1380, %v1483
    %v1485 = vrot.slane %v1367, %v1484
    %v1486 = vlaneseq
    %v1487 = vshrl.u32 %v1486, 7
    %v1488 = vsub.s32 %v1385, %v1487
    %v1489 = vrot.slane %v1368, %v1488
    %v1490 = vsel %vm1390, %v1489, %v1485
    %v1491 = vlaneseq
    %v1492 = vshrl.u32 %v1491, 7
    %v1493 = vsub.s32 %v1392, %v1492
    %v1494 = vrot.slane %v1369, %v1493
    %v1495 = vsel %vm1397, %v1494, %v1490
    %v1496 = vlaneseq
    %v1497 = vshrl.u32 %v1496, 7
    %v1498 = vsub.s32 %v1399, %v1497
    %v1499 = vrot.slane %v1370, %v1498
    %v1500 = vsel %vm1404, %v1499, %v1495
    %v1501 = vlaneseq
    %v1502 = vshrl.u32 %v1501, 7
    %v1503 = vsub.s32 %v1380, %v1502
    %v1504 = vrot.slane %v1371, %v1503
    %v1505 = vlaneseq
    %v1506 = vshrl.u32 %v1505, 7
    %v1507 = vsub.s32 %v1385, %v1506
    %v1508 = vrot.slane %v1372, %v1507
    %v1509 = vsel %vm1390, %v1508, %v1504
    %v1510 = vlaneseq
    %v1511 = vshrl.u32 %v1510, 7
    %v1512 = vsub.s32 %v1392, %v1511
    %v1513 = vrot.slane %v1373, %v1512
    %v1514 = vsel %vm1397, %v1513, %v1509
    %v1515 = vlaneseq
    %v1516 = vshrl.u32 %v1515, 7
    %v1517 = vsub.s32 %v1399, %v1516
    %v1518 = vrot.slane %v1374, %v1517
    %v1519 = vsel %vm1404, %v1518, %v1514
    %v1520 = vlaneseq
    %v1521 = vshrl.u32 %v1520, 7
    %v1522 = vsub.s32 %v1380, %v1521
    %v1523 = vrot.slane %v1375, %v1522
    %v1524 = vlaneseq
    %v1525 = vshrl.u32 %v1524, 7
    %v1526 = vsub.s32 %v1385, %v1525
    %v1527 = vrot.slane %v1376, %v1526
    %v1528 = vsel %vm1390, %v1527, %v1523
    %v1529 = vlaneseq
    %v1530 = vshrl.u32 %v1529, 7
    %v1531 = vsub.s32 %v1392, %v1530
    %v1532 = vrot.slane %v1377, %v1531
    %v1533 = vsel %vm1397, %v1532, %v1528
    %v1534 = vlaneseq
    %v1535 = vshrl.u32 %v1534, 7
    %v1536 = vsub.s32 %v1399, %v1535
    %v1537 = vrot.slane %v1378, %v1536
    %v1538 = vsel %vm1404, %v1537, %v1533
    %vm1539 = vcmask 1041409
    %v1540 = vsel %vm1539, %v1424, %v1405
    %vm1541 = vcmask 1042434
    %v1542 = vsel %vm1541, %v1443, %v1540
    %vm1543 = vcmask 1043459
    %v1544 = vsel %vm1543, %v1462, %v1542
    %vm1545 = vcmask 1044484
    %v1546 = vsel %vm1545, %v1481, %v1544
    %vm1547 = vcmask 1045509
    %v1548 = vsel %vm1547, %v1500, %v1546
    %vm1549 = vcmask 1046534
    %v1550 = vsel %vm1549, %v1519, %v1548
    %vm1551 = vcmask 1047559
    %v1552 = vsel %vm1551, %v1538, %v1550
    %v1553 = vpack.c.b16 %v1552, %v1552
    %v1558 = vunpack.c.l.b16 %v1320
    %v1559 = vunpack.c.l.b16 %v1321
    %v1560 = vunpack.c.l.b16 %v1322
    %v1561 = vunpack.c.l.b16 %v1323
    %v1562 = vpack.c.b16 %v1559, %v1558
    %v1563 = vpack.c.b16 %v1561, %v1560
    %vm1566 = vcmask 261120
    %v1568 = vsel %vm1566, %v1553, 0
    %1570 = vmatprep.subr.bf16.mxu0 0
    %1571 = vmatpush1.bf16.msra.mxu0 %v1562
    %1572 = vmatprep.subr.bf16.mxu0 0
    %1573 = vmatpush1.bf16.msra.mxu0 %v1563
    %1574 = vmatprep.subr.bf16.mxu0 0
    %1575 = vmatpush1.bf16.msra.mxu0 0
    %1576 = vmatprep.subr.bf16.mxu0 0
    %1577 = vmatpush1.bf16.msra.mxu0 0
    %1578 = vmatprep.subr.bf16.mxu0 0
    %1579 = vmatpush1.bf16.msra.mxu0 0
    %1580 = vmatprep.subr.bf16.mxu0 0
    %1581 = vmatpush1.bf16.msra.mxu0 0
    %1582 = vmatprep.subr.bf16.mxu0 0
    %1583 = vmatpush1.bf16.msra.mxu0 0
    %1584 = vmatprep.subr.bf16.mxu0 0
    %1585 = vmatpush1.bf16.msra.mxu0 0
    %1586 = vmatprep.subr.bf16.mxu0 0
    %1587 = vmatpush1.bf16.msra.mxu0 0
    %1588 = vmatprep.subr.bf16.mxu0 0
    %1589 = vmatpush1.bf16.msra.mxu0 0
    %1590 = vmatprep.subr.bf16.mxu0 0
    %1591 = vmatpush1.bf16.msra.mxu0 0
    %1592 = vmatprep.subr.bf16.mxu0 0
    %1593 = vmatpush1.bf16.msra.mxu0 0
    %1594 = vmatprep.subr.bf16.mxu0 0
    %1595 = vmatpush1.bf16.msra.mxu0 0
    %1596 = vmatprep.subr.bf16.mxu0 0
    %1597 = vmatpush1.bf16.msra.mxu0 0
    %1598 = vmatprep.subr.bf16.mxu0 0
    %1599 = vmatpush1.bf16.msra.mxu0 0
    %1600 = vmatprep.subr.bf16.mxu0 0
    %1601 = vmatpush1.bf16.msra.mxu0 0
    %1602 = vmatprep.mubr.bf16.mxu0 0
    %1603 = vmatmul.mubr.bf16.gmra.mrb[0].mxu0 %v1568
    %v1604 = vpop.f32.mrb[0].mxu0
    %v1605 = vadd.f32 %v1329, %v1604
    %v1606 = vpop.f32.mrb[0].mxu0
    %v1607 = vpop.f32.mrb[0].mxu0
    %v1608 = vpop.f32.mrb[0].mxu0
    %1609 = vdwg.mxu0
    %v1610 = vld [vmem:[%s7] sm:$0xff]
    %v1611 = vld [vmem:[%s7 + $0x8] sm:$0xff]
    %v1612 = vld [vmem:[%s7 + $0x10] sm:$0xff]
    %v1613 = vld [vmem:[%s7 + $0x18] sm:$0xff]
    %1615 = vset.pattern.permute.xlu0 0
    %1616 = vperm.xlu0 %1615, %v1610
    %v1617 = vpop.permute.xlu0 %1616
    %1620 = vset.pattern.permute.xlu0 0
    %1621 = vperm.xlu0 %1620, %v1611
    %v1622 = vpop.permute.xlu0 %1621
    %1625 = vset.pattern.permute.xlu0 0
    %1626 = vperm.xlu0 %1625, %v1612
    %v1627 = vpop.permute.xlu0 %1626
    %1630 = vset.pattern.permute.xlu0 0
    %1631 = vperm.xlu0 %1630, %v1613
    %v1632 = vpop.permute.xlu0 %1631
    %v1634 = vmul.f32 %v1143, %v1617
    %v1635 = vmul.f32 %v1144, %v1622
    %v1636 = vmul.f32 %v1145, %v1627
    %v1637 = vmul.f32 %v1146, %v1632
    %v1638 = vmul.f32 %v1147, %v1617
    %v1639 = vmul.f32 %v1148, %v1622
    %v1640 = vmul.f32 %v1149, %v1627
    %v1641 = vmul.f32 %v1150, %v1632
    %v1642 = vmul.f32 %v1151, %v1617
    %v1643 = vmul.f32 %v1152, %v1622
    %v1644 = vmul.f32 %v1153, %v1627
    %v1645 = vmul.f32 %v1154, %v1632
    %v1646 = vmul.f32 %v1155, %v1617
    %v1647 = vmul.f32 %v1156, %v1622
    %v1648 = vmul.f32 %v1157, %v1627
    %v1649 = vmul.f32 %v1158, %v1632
    %v1650 = vmul.f32 %v1159, %v1617
    %v1651 = vmul.f32 %v1160, %v1622
    %v1652 = vmul.f32 %v1161, %v1627
    %v1653 = vmul.f32 %v1162, %v1632
    %v1654 = vmul.f32 %v1163, %v1617
    %v1655 = vmul.f32 %v1164, %v1622
    %v1656 = vmul.f32 %v1165, %v1627
    %v1657 = vmul.f32 %v1166, %v1632
    %v1658 = vmul.f32 %v1167, %v1617
    %v1659 = vmul.f32 %v1168, %v1622
    %v1660 = vmul.f32 %v1169, %v1627
    %v1661 = vmul.f32 %v1170, %v1632
    %v1662 = vmul.f32 %v1171, %v1617
    %v1663 = vmul.f32 %v1172, %v1622
    %v1664 = vmul.f32 %v1173, %v1627
    %v1665 = vmul.f32 %v1174, %v1632
    %v1666 = vsel %vm432, %v1634, 0.0
    %v1667 = vsel %vm432, %v1635, 0.0
    %v1668 = vadd.f32 %v1666, %v1667
    %v1669 = vsel %vm432, %v1636, 0.0
    %v1670 = vadd.f32 %v1668, %v1669
    %v1671 = vsel %vm432, %v1637, 0.0
    %v1672 = vadd.f32 %v1670, %v1671
    %v1673 = vrot.slane %v1672, 4
    %v1674 = vadd.f32 %v1672, %v1673
    %v1675 = vrot.slane %v1674, 2
    %v1676 = vadd.f32 %v1674, %v1675
    %v1677 = vrot.slane %v1676, 1
    %v1678 = vadd.f32 %v1676, %v1677
    %v1679 = vsel %vm432, %v1638, 0.0
    %v1680 = vsel %vm432, %v1639, 0.0
    %v1681 = vadd.f32 %v1679, %v1680
    %v1682 = vsel %vm432, %v1640, 0.0
    %v1683 = vadd.f32 %v1681, %v1682
    %v1684 = vsel %vm432, %v1641, 0.0
    %v1685 = vadd.f32 %v1683, %v1684
    %v1686 = vrot.slane %v1685, 4
    %v1687 = vadd.f32 %v1685, %v1686
    %v1688 = vrot.slane %v1687, 2
    %v1689 = vadd.f32 %v1687, %v1688
    %v1690 = vrot.slane %v1689, 1
    %v1691 = vadd.f32 %v1689, %v1690
    %v1692 = vsel %vm432, %v1642, 0.0
    %v1693 = vsel %vm432, %v1643, 0.0
    %v1694 = vadd.f32 %v1692, %v1693
    %v1695 = vsel %vm432, %v1644, 0.0
    %v1696 = vadd.f32 %v1694, %v1695
    %v1697 = vsel %vm432, %v1645, 0.0
    %v1698 = vadd.f32 %v1696, %v1697
    %v1699 = vrot.slane %v1698, 4
    %v1700 = vadd.f32 %v1698, %v1699
    %v1701 = vrot.slane %v1700, 2
    %v1702 = vadd.f32 %v1700, %v1701
    %v1703 = vrot.slane %v1702, 1
    %v1704 = vadd.f32 %v1702, %v1703
    %v1705 = vsel %vm432, %v1646, 0.0
    %v1706 = vsel %vm432, %v1647, 0.0
    %v1707 = vadd.f32 %v1705, %v1706
    %v1708 = vsel %vm432, %v1648, 0.0
    %v1709 = vadd.f32 %v1707, %v1708
    %v1710 = vsel %vm432, %v1649, 0.0
    %v1711 = vadd.f32 %v1709, %v1710
    %v1712 = vrot.slane %v1711, 4
    %v1713 = vadd.f32 %v1711, %v1712
    %v1714 = vrot.slane %v1713, 2
    %v1715 = vadd.f32 %v1713, %v1714
    %v1716 = vrot.slane %v1715, 1
    %v1717 = vadd.f32 %v1715, %v1716
    %v1718 = vsel %vm432, %v1650, 0.0
    %v1719 = vsel %vm432, %v1651, 0.0
    %v1720 = vadd.f32 %v1718, %v1719
    %v1721 = vsel %vm432, %v1652, 0.0
    %v1722 = vadd.f32 %v1720, %v1721
    %v1723 = vsel %vm432, %v1653, 0.0
    %v1724 = vadd.f32 %v1722, %v1723
    %v1725 = vrot.slane %v1724, 4
    %v1726 = vadd.f32 %v1724, %v1725
    %v1727 = vrot.slane %v1726, 2
    %v1728 = vadd.f32 %v1726, %v1727
    %v1729 = vrot.slane %v1728, 1
    %v1730 = vadd.f32 %v1728, %v1729
    %v1731 = vsel %vm432, %v1654, 0.0
    %v1732 = vsel %vm432, %v1655, 0.0
    %v1733 = vadd.f32 %v1731, %v1732
    %v1734 = vsel %vm432, %v1656, 0.0
    %v1735 = vadd.f32 %v1733, %v1734
    %v1736 = vsel %vm432, %v1657, 0.0
    %v1737 = vadd.f32 %v1735, %v1736
    %v1738 = vrot.slane %v1737, 4
    %v1739 = vadd.f32 %v1737, %v1738
    %v1740 = vrot.slane %v1739, 2
    %v1741 = vadd.f32 %v1739, %v1740
    %v1742 = vrot.slane %v1741, 1
    %v1743 = vadd.f32 %v1741, %v1742
    %v1744 = vsel %vm432, %v1658, 0.0
    %v1745 = vsel %vm432, %v1659, 0.0
    %v1746 = vadd.f32 %v1744, %v1745
    %v1747 = vsel %vm432, %v1660, 0.0
    %v1748 = vadd.f32 %v1746, %v1747
    %v1749 = vsel %vm432, %v1661, 0.0
    %v1750 = vadd.f32 %v1748, %v1749
    %v1751 = vrot.slane %v1750, 4
    %v1752 = vadd.f32 %v1750, %v1751
    %v1753 = vrot.slane %v1752, 2
    %v1754 = vadd.f32 %v1752, %v1753
    %v1755 = vrot.slane %v1754, 1
    %v1756 = vadd.f32 %v1754, %v1755
    %v1757 = vsel %vm432, %v1662, 0.0
    %v1758 = vsel %vm432, %v1663, 0.0
    %v1759 = vadd.f32 %v1757, %v1758
    %v1760 = vsel %vm432, %v1664, 0.0
    %v1761 = vadd.f32 %v1759, %v1760
    %v1762 = vsel %vm432, %v1665, 0.0
    %v1763 = vadd.f32 %v1761, %v1762
    %v1764 = vrot.slane %v1763, 4
    %v1765 = vadd.f32 %v1763, %v1764
    %v1766 = vrot.slane %v1765, 2
    %v1767 = vadd.f32 %v1765, %v1766
    %v1768 = vrot.slane %v1767, 1
    %v1769 = vadd.f32 %v1767, %v1768
    %1770 = vset.pattern.permute.xlu0 1
    %1771 = vperm.xlu0 %1770, %v1610
    %v1772 = vpop.permute.xlu0 %1771
    %1774 = vset.pattern.permute.xlu0 1
    %1775 = vperm.xlu0 %1774, %v1611
    %v1776 = vpop.permute.xlu0 %1775
    %1778 = vset.pattern.permute.xlu0 1
    %1779 = vperm.xlu0 %1778, %v1612
    %v1780 = vpop.permute.xlu0 %1779
    %1782 = vset.pattern.permute.xlu0 1
    %1783 = vperm.xlu0 %1782, %v1613
    %v1784 = vpop.permute.xlu0 %1783
    %v1786 = vmul.f32 %v1143, %v1772
    %v1787 = vmul.f32 %v1144, %v1776
    %v1788 = vmul.f32 %v1145, %v1780
    %v1789 = vmul.f32 %v1146, %v1784
    %v1790 = vmul.f32 %v1147, %v1772
    %v1791 = vmul.f32 %v1148, %v1776
    %v1792 = vmul.f32 %v1149, %v1780
    %v1793 = vmul.f32 %v1150, %v1784
    %v1794 = vmul.f32 %v1151, %v1772
    %v1795 = vmul.f32 %v1152, %v1776
    %v1796 = vmul.f32 %v1153, %v1780
    %v1797 = vmul.f32 %v1154, %v1784
    %v1798 = vmul.f32 %v1155, %v1772
    %v1799 = vmul.f32 %v1156, %v1776
    %v1800 = vmul.f32 %v1157, %v1780
    %v1801 = vmul.f32 %v1158, %v1784
    %v1802 = vmul.f32 %v1159, %v1772
    %v1803 = vmul.f32 %v1160, %v1776
    %v1804 = vmul.f32 %v1161, %v1780
    %v1805 = vmul.f32 %v1162, %v1784
    %v1806 = vmul.f32 %v1163, %v1772
    %v1807 = vmul.f32 %v1164, %v1776
    %v1808 = vmul.f32 %v1165, %v1780
    %v1809 = vmul.f32 %v1166, %v1784
    %v1810 = vmul.f32 %v1167, %v1772
    %v1811 = vmul.f32 %v1168, %v1776
    %v1812 = vmul.f32 %v1169, %v1780
    %v1813 = vmul.f32 %v1170, %v1784
    %v1814 = vmul.f32 %v1171, %v1772
    %v1815 = vmul.f32 %v1172, %v1776
    %v1816 = vmul.f32 %v1173, %v1780
    %v1817 = vmul.f32 %v1174, %v1784
    %v1818 = vsel %vm432, %v1786, 0.0
    %v1819 = vsel %vm432, %v1787, 0.0
    %v1820 = vadd.f32 %v1818, %v1819
    %v1821 = vsel %vm432, %v1788, 0.0
    %v1822 = vadd.f32 %v1820, %v1821
    %v1823 = vsel %vm432, %v1789, 0.0
    %v1824 = vadd.f32 %v1822, %v1823
    %v1825 = vrot.slane %v1824, 4
    %v1826 = vadd.f32 %v1824, %v1825
    %v1827 = vrot.slane %v1826, 2
    %v1828 = vadd.f32 %v1826, %v1827
    %v1829 = vrot.slane %v1828, 1
    %v1830 = vadd.f32 %v1828, %v1829
    %v1831 = vsel %vm432, %v1790, 0.0
    %v1832 = vsel %vm432, %v1791, 0.0
    %v1833 = vadd.f32 %v1831, %v1832
    %v1834 = vsel %vm432, %v1792, 0.0
    %v1835 = vadd.f32 %v1833, %v1834
    %v1836 = vsel %vm432, %v1793, 0.0
    %v1837 = vadd.f32 %v1835, %v1836
    %v1838 = vrot.slane %v1837, 4
    %v1839 = vadd.f32 %v1837, %v1838
    %v1840 = vrot.slane %v1839, 2
    %v1841 = vadd.f32 %v1839, %v1840
    %v1842 = vrot.slane %v1841, 1
    %v1843 = vadd.f32 %v1841, %v1842
    %v1844 = vsel %vm432, %v1794, 0.0
    %v1845 = vsel %vm432, %v1795, 0.0
    %v1846 = vadd.f32 %v1844, %v1845
    %v1847 = vsel %vm432, %v1796, 0.0
    %v1848 = vadd.f32 %v1846, %v1847
    %v1849 = vsel %vm432, %v1797, 0.0
    %v1850 = vadd.f32 %v1848, %v1849
    %v1851 = vrot.slane %v1850, 4
    %v1852 = vadd.f32 %v1850, %v1851
    %v1853 = vrot.slane %v1852, 2
    %v1854 = vadd.f32 %v1852, %v1853
    %v1855 = vrot.slane %v1854, 1
    %v1856 = vadd.f32 %v1854, %v1855
    %v1857 = vsel %vm432, %v1798, 0.0
    %v1858 = vsel %vm432, %v1799, 0.0
    %v1859 = vadd.f32 %v1857, %v1858
    %v1860 = vsel %vm432, %v1800, 0.0
    %v1861 = vadd.f32 %v1859, %v1860
    %v1862 = vsel %vm432, %v1801, 0.0
    %v1863 = vadd.f32 %v1861, %v1862
    %v1864 = vrot.slane %v1863, 4
    %v1865 = vadd.f32 %v1863, %v1864
    %v1866 = vrot.slane %v1865, 2
    %v1867 = vadd.f32 %v1865, %v1866
    %v1868 = vrot.slane %v1867, 1
    %v1869 = vadd.f32 %v1867, %v1868
    %v1870 = vsel %vm432, %v1802, 0.0
    %v1871 = vsel %vm432, %v1803, 0.0
    %v1872 = vadd.f32 %v1870, %v1871
    %v1873 = vsel %vm432, %v1804, 0.0
    %v1874 = vadd.f32 %v1872, %v1873
    %v1875 = vsel %vm432, %v1805, 0.0
    %v1876 = vadd.f32 %v1874, %v1875
    %v1877 = vrot.slane %v1876, 4
    %v1878 = vadd.f32 %v1876, %v1877
    %v1879 = vrot.slane %v1878, 2
    %v1880 = vadd.f32 %v1878, %v1879
    %v1881 = vrot.slane %v1880, 1
    %v1882 = vadd.f32 %v1880, %v1881
    %v1883 = vsel %vm432, %v1806, 0.0
    %v1884 = vsel %vm432, %v1807, 0.0
    %v1885 = vadd.f32 %v1883, %v1884
    %v1886 = vsel %vm432, %v1808, 0.0
    %v1887 = vadd.f32 %v1885, %v1886
    %v1888 = vsel %vm432, %v1809, 0.0
    %v1889 = vadd.f32 %v1887, %v1888
    %v1890 = vrot.slane %v1889, 4
    %v1891 = vadd.f32 %v1889, %v1890
    %v1892 = vrot.slane %v1891, 2
    %v1893 = vadd.f32 %v1891, %v1892
    %v1894 = vrot.slane %v1893, 1
    %v1895 = vadd.f32 %v1893, %v1894
    %v1896 = vsel %vm432, %v1810, 0.0
    %v1897 = vsel %vm432, %v1811, 0.0
    %v1898 = vadd.f32 %v1896, %v1897
    %v1899 = vsel %vm432, %v1812, 0.0
    %v1900 = vadd.f32 %v1898, %v1899
    %v1901 = vsel %vm432, %v1813, 0.0
    %v1902 = vadd.f32 %v1900, %v1901
    %v1903 = vrot.slane %v1902, 4
    %v1904 = vadd.f32 %v1902, %v1903
    %v1905 = vrot.slane %v1904, 2
    %v1906 = vadd.f32 %v1904, %v1905
    %v1907 = vrot.slane %v1906, 1
    %v1908 = vadd.f32 %v1906, %v1907
    %v1909 = vsel %vm432, %v1814, 0.0
    %v1910 = vsel %vm432, %v1815, 0.0
    %v1911 = vadd.f32 %v1909, %v1910
    %v1912 = vsel %vm432, %v1816, 0.0
    %v1913 = vadd.f32 %v1911, %v1912
    %v1914 = vsel %vm432, %v1817, 0.0
    %v1915 = vadd.f32 %v1913, %v1914
    %v1916 = vrot.slane %v1915, 4
    %v1917 = vadd.f32 %v1915, %v1916
    %v1918 = vrot.slane %v1917, 2
    %v1919 = vadd.f32 %v1917, %v1918
    %v1920 = vrot.slane %v1919, 1
    %v1921 = vadd.f32 %v1919, %v1920
    %vm1922 = vcmask 1040384
    %v1923 = vsel %vm1922, %v1678, %v1830
    %v1924 = vsel %vm1922, %v1691, %v1843
    %v1925 = vsel %vm1922, %v1704, %v1856
    %v1926 = vsel %vm1922, %v1717, %v1869
    %v1927 = vsel %vm1922, %v1730, %v1882
    %v1928 = vsel %vm1922, %v1743, %v1895
    %v1929 = vsel %vm1922, %v1756, %v1908
    %v1930 = vsel %vm1922, %v1769, %v1921
    %v1931 = vld [vmem:[%s8] sm:$0x3]
    %1933 = vset.pattern.permute.xlu0 0
    %1934 = vperm.xlu0 %1933, %v1931
    %v1935 = vpop.permute.xlu0 %1934
    %v1937 = vadd.f32 %v1923, %v1935
    %v1938 = vadd.f32 %v1924, %v1935
    %v1939 = vadd.f32 %v1925, %v1935
    %v1940 = vadd.f32 %v1926, %v1935
    %v1941 = vadd.f32 %v1927, %v1935
    %v1942 = vadd.f32 %v1928, %v1935
    %v1943 = vadd.f32 %v1929, %v1935
    %v1944 = vadd.f32 %v1930, %v1935
    %vm1945 = vcmask 730112
    %1946 = vst.msk [vmem:[#allocation2] sm:$0x3] %vm1945, %v1937
    %1947 = vst.msk [vmem:[#allocation2 + $0x2] sm:$0x3] %vm1945, %v1938
    %1948 = vst.msk [vmem:[#allocation2 + $0x4] sm:$0x3] %vm1945, %v1939
    %1949 = vst.msk [vmem:[#allocation2 + $0x6] sm:$0x3] %vm1945, %v1940
    %1950 = vst.msk [vmem:[#allocation2 + $0x8] sm:$0x3] %vm1945, %v1941
    %1951 = vst.msk [vmem:[#allocation2 + $0xa] sm:$0x3] %vm1945, %v1942
    %1952 = vst.msk [vmem:[#allocation2 + $0xc] sm:$0x3] %vm1945, %v1943
    %1953 = vst.msk [vmem:[#allocation2 + $0xe] sm:$0x3] %vm1945, %v1944
    %v1954 = vpack.c.bf16 %v1605, %v1605
    %v1955 = vld [vmem:[%s9] sm:$0xf]
    %v1956 = vld [vmem:[%s9 + $0x4] sm:$0xf]
    %v1957 = vld [vmem:[%s9 + $0x8] sm:$0xf]
    %v1958 = vld [vmem:[%s9 + $0xc] sm:$0xf]
    %v1959 = vld [vmem:[%s9 + $0x10] sm:$0xf]
    %v1960 = vld [vmem:[%s9 + $0x14] sm:$0xf]
    %v1961 = vld [vmem:[%s9 + $0x18] sm:$0xf]
    %v1962 = vld [vmem:[%s9 + $0x1c] sm:$0xf]
    %v1963 = vld [vmem:[%s9 + $0x20] sm:$0xf]
    %v1964 = vld [vmem:[%s9 + $0x24] sm:$0xf]
    %v1965 = vld [vmem:[%s9 + $0x28] sm:$0xf]
    %v1966 = vld [vmem:[%s9 + $0x2c] sm:$0xf]
    %v1967 = vld [vmem:[%s9 + $0x30] sm:$0xf]
    %v1968 = vld [vmem:[%s9 + $0x34] sm:$0xf]
    %v1969 = vld [vmem:[%s9 + $0x38] sm:$0xf]
    %v1970 = vld [vmem:[%s9 + $0x3c] sm:$0xf]
    %v1971 = vld [vmem:[%s2] sm:$0xff]
    %v1972 = vld [vmem:[%s10] sm:$0xf]
    %v1973 = vld [vmem:[%s10 + $0x4] sm:$0xf]
    %v1974 = vld [vmem:[%s10 + $0x8] sm:$0xf]
    %v1975 = vld [vmem:[%s10 + $0xc] sm:$0xf]
    %v1976 = vld [vmem:[%s10 + $0x10] sm:$0xf]
    %v1977 = vld [vmem:[%s10 + $0x14] sm:$0xf]
    %v1978 = vld [vmem:[%s10 + $0x18] sm:$0xf]
    %v1979 = vld [vmem:[%s10 + $0x1c] sm:$0xf]
    %v1980 = vld [vmem:[%s10 + $0x20] sm:$0xf]
    %v1981 = vld [vmem:[%s10 + $0x24] sm:$0xf]
    %v1982 = vld [vmem:[%s10 + $0x28] sm:$0xf]
    %v1983 = vld [vmem:[%s10 + $0x2c] sm:$0xf]
    %v1984 = vld [vmem:[%s10 + $0x30] sm:$0xf]
    %v1985 = vld [vmem:[%s10 + $0x34] sm:$0xf]
    %v1986 = vld [vmem:[%s10 + $0x38] sm:$0xf]
    %v1987 = vld [vmem:[%s10 + $0x3c] sm:$0xf]
    %v1988 = vld [vmem:[%s10 + $0x40] sm:$0xf]
    %v1989 = vld [vmem:[%s10 + $0x44] sm:$0xf]
    %v1990 = vld [vmem:[%s10 + $0x48] sm:$0xf]
    %v1991 = vld [vmem:[%s10 + $0x4c] sm:$0xf]
    %v1992 = vld [vmem:[%s10 + $0x50] sm:$0xf]
    %v1993 = vld [vmem:[%s10 + $0x54] sm:$0xf]
    %v1994 = vld [vmem:[%s10 + $0x58] sm:$0x3]
    %v1996 = vunpack.c.l.b16 %v1971
    %v1997 = vunpack.c.h.b16 %v1971
    %v1998 = vpack.c.b16 %v1996, %v1996
    %v1999 = vpack.c.b16 %v1997, %v1997
    %v2024 = vunpack.c.l.b16 %v1972
    %v2025 = vunpack.c.l.b16 %v1973
    %v2026 = vunpack.c.l.b16 %v1974
    %v2027 = vunpack.c.l.b16 %v1975
    %v2028 = vunpack.c.l.b16 %v1976
    %v2029 = vunpack.c.l.b16 %v1977
    %v2030 = vunpack.c.l.b16 %v1978
    %v2031 = vunpack.c.l.b16 %v1979
    %v2032 = vunpack.c.l.b16 %v1980
    %v2033 = vunpack.c.l.b16 %v1981
    %v2034 = vunpack.c.l.b16 %v1982
    %v2035 = vunpack.c.l.b16 %v1983
    %v2036 = vunpack.c.l.b16 %v1984
    %v2037 = vunpack.c.l.b16 %v1985
    %v2038 = vunpack.c.l.b16 %v1986
    %v2039 = vunpack.c.l.b16 %v1987
    %v2040 = vunpack.c.l.b16 %v1988
    %v2041 = vunpack.c.l.b16 %v1989
    %v2042 = vunpack.c.l.b16 %v1990
    %v2043 = vunpack.c.l.b16 %v1991
    %v2044 = vunpack.c.l.b16 %v1992
    %v2045 = vunpack.c.l.b16 %v1993
    %v2046 = vunpack.c.l.b16 %v1994
    %v2047 = vpack.c.b16 %v2025, %v2024
    %v2048 = vpack.c.b16 %v2027, %v2026
    %v2049 = vpack.c.b16 %v2029, %v2028
    %v2050 = vpack.c.b16 %v2031, %v2030
    %v2051 = vpack.c.b16 %v2033, %v2032
    %v2052 = vpack.c.b16 %v2035, %v2034
    %v2053 = vpack.c.b16 %v2037, %v2036
    %v2054 = vpack.c.b16 %v2039, %v2038
    %v2055 = vpack.c.b16 %v2041, %v2040
    %v2056 = vpack.c.b16 %v2043, %v2042
    %v2057 = vpack.c.b16 %v2045, %v2044
    %v2058 = vpack.c.b16 %v2046, %v2046
    %vm2070 = vcmask 424960
    %v2072 = vsel %vm2070, %v1999, 0
    %vm2074 = vcmask 1041408
    %v2076 = vsel %vm2074, %v2058, 0
    %2078 = vmatprep.subr.bf16.mxu0 0
    %2079 = vmatpush1.bf16.msra.mxu0 %v2047
    %2080 = vmatprep.subr.bf16.mxu0 0
    %2081 = vmatpush1.bf16.msra.mxu0 %v2048
    %2082 = vmatprep.subr.bf16.mxu0 0
    %2083 = vmatpush1.bf16.msra.mxu0 %v2049
    %2084 = vmatprep.subr.bf16.mxu0 0
    %2085 = vmatpush1.bf16.msra.mxu0 %v2050
    %2086 = vmatprep.subr.bf16.mxu0 0
    %2087 = vmatpush1.bf16.msra.mxu0 %v2051
    %2088 = vmatprep.subr.bf16.mxu0 0
    %2089 = vmatpush1.bf16.msra.mxu0 %v2052
    %2090 = vmatprep.subr.bf16.mxu0 0
    %2091 = vmatpush1.bf16.msra.mxu0 %v2053
    %2092 = vmatprep.subr.bf16.mxu0 0
    %2093 = vmatpush1.bf16.msra.mxu0 %v2054
    %2094 = vmatprep.subr.bf16.mxu0 0
    %2095 = vmatpush1.bf16.msra.mxu0 %v2055
    %2096 = vmatprep.subr.bf16.mxu0 0
    %2097 = vmatpush1.bf16.msra.mxu0 %v2056
    %2098 = vmatprep.subr.bf16.mxu0 0
    %2099 = vmatpush1.bf16.msra.mxu0 %v2057
    %2100 = vmatprep.subr.bf16.mxu0 0
    %2101 = vmatpush1.bf16.msra.mxu0 %v2076
    %2102 = vmatprep.subr.bf16.mxu0 0
    %2103 = vmatpush1.bf16.msra.mxu0 0
    %2104 = vmatprep.subr.bf16.mxu0 0
    %2105 = vmatpush1.bf16.msra.mxu0 0
    %2106 = vmatprep.subr.bf16.mxu0 0
    %2107 = vmatpush1.bf16.msra.mxu0 0
    %2108 = vmatprep.subr.bf16.mxu0 0
    %2109 = vmatpush1.bf16.msra.mxu0 0
    %2110 = vmatprep.mubr.bf16.mxu0 %v2072
    %2111 = vmatmul.mubr.bf16.gmra.mrb[0].mxu0 %v1998
    %v2112 = vpop.f32.mrb[0].mxu0
    %v2113 = vadd.f32 0.0, %v2112
    %v2114 = vpop.f32.mrb[0].mxu0
    %v2115 = vpop.f32.mrb[0].mxu0
    %v2116 = vpop.f32.mrb[0].mxu0
    %2117 = vdwg.mxu0
    %v2134 = vunpack.c.l.b16 %v1955
    %v2135 = vunpack.c.l.b16 %v1956
    %v2136 = vunpack.c.l.b16 %v1957
    %v2137 = vunpack.c.l.b16 %v1958
    %v2138 = vunpack.c.l.b16 %v1959
    %v2139 = vunpack.c.l.b16 %v1960
    %v2140 = vunpack.c.l.b16 %v1961
    %v2141 = vunpack.c.l.b16 %v1962
    %v2142 = vunpack.c.l.b16 %v1963
    %v2143 = vunpack.c.l.b16 %v1964
    %v2144 = vunpack.c.l.b16 %v1965
    %v2145 = vunpack.c.l.b16 %v1966
    %v2146 = vunpack.c.l.b16 %v1967
    %v2147 = vunpack.c.l.b16 %v1968
    %v2148 = vunpack.c.l.b16 %v1969
    %v2149 = vunpack.c.l.b16 %v1970
    %v2150 = vpack.c.b16 %v2135, %v2134
    %v2151 = vpack.c.b16 %v2137, %v2136
    %v2152 = vpack.c.b16 %v2139, %v2138
    %v2153 = vpack.c.b16 %v2141, %v2140
    %v2154 = vpack.c.b16 %v2143, %v2142
    %v2155 = vpack.c.b16 %v2145, %v2144
    %v2156 = vpack.c.b16 %v2147, %v2146
    %v2157 = vpack.c.b16 %v2149, %v2148
    %2166 = vmatprep.subr.bf16.mxu0 0
    %2167 = vmatpush1.bf16.msra.mxu0 %v2150
    %2168 = vmatprep.subr.bf16.mxu0 0
    %2169 = vmatpush1.bf16.msra.mxu0 %v2151
    %2170 = vmatprep.subr.bf16.mxu0 0
    %2171 = vmatpush1.bf16.msra.mxu0 %v2152
    %2172 = vmatprep.subr.bf16.mxu0 0
    %2173 = vmatpush1.bf16.msra.mxu0 %v2153
    %2174 = vmatprep.subr.bf16.mxu0 0
    %2175 = vmatpush1.bf16.msra.mxu0 %v2154
    %2176 = vmatprep.subr.bf16.mxu0 0
    %2177 = vmatpush1.bf16.msra.mxu0 %v2155
    %2178 = vmatprep.subr.bf16.mxu0 0
    %2179 = vmatpush1.bf16.msra.mxu0 %v2156
    %2180 = vmatprep.subr.bf16.mxu0 0
    %2181 = vmatpush1.bf16.msra.mxu0 %v2157
    %2182 = vmatprep.subr.bf16.mxu0 0
    %2183 = vmatpush1.bf16.msra.mxu0 0
    %2184 = vmatprep.subr.bf16.mxu0 0
    %2185 = vmatpush1.bf16.msra.mxu0 0
    %2186 = vmatprep.subr.bf16.mxu0 0
    %2187 = vmatpush1.bf16.msra.mxu0 0
    %2188 = vmatprep.subr.bf16.mxu0 0
    %2189 = vmatpush1.bf16.msra.mxu0 0
    %2190 = vmatprep.subr.bf16.mxu0 0
    %2191 = vmatpush1.bf16.msra.mxu0 0
    %2192 = vmatprep.subr.bf16.mxu0 0
    %2193 = vmatpush1.bf16.msra.mxu0 0
    %2194 = vmatprep.subr.bf16.mxu0 0
    %2195 = vmatpush1.bf16.msra.mxu0 0
    %2196 = vmatprep.subr.bf16.mxu0 0
    %2197 = vmatpush1.bf16.msra.mxu0 0
    %2198 = vmatprep.mubr.bf16.mxu0 0
    %2199 = vmatmul.mubr.bf16.gmra.mrb[0].mxu0 %v1954
    %v2200 = vpop.f32.mrb[0].mxu0
    %v2201 = vadd.f32 %v2113, %v2200
    %v2202 = vpop.f32.mrb[0].mxu0
    %v2203 = vpop.f32.mrb[0].mxu0
    %v2204 = vpop.f32.mrb[0].mxu0
    %2205 = vdwg.mxu0
    %v2206 = vld [vmem:[%s11] sm:$0x1]
    %v2208 = vlaneseq
    %v2209 = vshrl.u32 %v2208, 7
    %v2210 = vsub.s32 0, %v2209
    %v2211 = vrot.slane %v2206, %v2210
    %v2213 = vadd.f32 %v2201, %v2211
    %v2214 = vmax.f32 %v2213, 0.0
    %vm2215 = vcmask 523264
    %2216 = vst.msk [vmem:[#allocation4] sm:$0xff] %vm2215, %v2214
    %v2217 = vld [vmem:[%s12] sm:$0xff]
    %v2218 = vld [vmem:[%s12 + $0x8] sm:$0xff]
    %v2219 = vld [vmem:[%s12 + $0x10] sm:$0xff]
    %v2220 = vld [vmem:[%s12 + $0x18] sm:$0xff]
    %v2221 = vld [vmem:[%s12 + $0x20] sm:$0xff]
    %v2222 = vld [vmem:[%s12 + $0x28] sm:$0xff]
    %v2223 = vld [vmem:[%s12 + $0x30] sm:$0xff]
    %v2224 = vld [vmem:[%s12 + $0x38] sm:$0xff]
    %v2225 = vld [vmem:[%s13] sm:$0x1]
    %v2227 = vlaneseq
    %v2228 = vshrl.u32 %v2227, 7
    %v2229 = vsub.s32 0, %v2228
    %v2230 = vrot.slane %v2225, %v2229
    %v2233 = vsel %vm2215, %v2214, 0
    %2235 = vmatprep.subr.mxu0 0.0
    %2236 = vmatpush1.msra.mxu0 %v2217
    %2237 = vmatprep.subr.mxu0 0.0
    %2238 = vmatpush1.msra.mxu0 %v2218
    %2239 = vmatprep.subr.mxu0 0.0
    %2240 = vmatpush1.msra.mxu0 %v2219
    %2241 = vmatprep.subr.mxu0 0.0
    %2242 = vmatpush1.msra.mxu0 %v2220
    %2243 = vmatprep.subr.mxu0 0.0
    %2244 = vmatpush1.msra.mxu0 %v2221
    %2245 = vmatprep.subr.mxu0 0.0
    %2246 = vmatpush1.msra.mxu0 %v2222
    %2247 = vmatprep.subr.mxu0 0.0
    %2248 = vmatpush1.msra.mxu0 %v2223
    %2249 = vmatprep.subr.mxu0 0.0
    %2250 = vmatpush1.msra.mxu0 %v2224
    %2251 = vmatprep.subr.mxu0 0.0
    %2252 = vmatpush1.msra.mxu0 0.0
    %2253 = vmatprep.subr.mxu0 0.0
    %2254 = vmatpush1.msra.mxu0 0.0
    %2255 = vmatprep.subr.mxu0 0.0
    %2256 = vmatpush1.msra.mxu0 0.0
    %2257 = vmatprep.subr.mxu0 0.0
    %2258 = vmatpush1.msra.mxu0 0.0
    %2259 = vmatprep.subr.mxu0 0.0
    %2260 = vmatpush1.msra.mxu0 0.0
    %2261 = vmatprep.subr.mxu0 0.0
    %2262 = vmatpush1.msra.mxu0 0.0
    %2263 = vmatprep.subr.mxu0 0.0
    %2264 = vmatpush1.msra.mxu0 0.0
    %2265 = vmatprep.subr.mxu0 0.0
    %2266 = vmatpush1.msra.mxu0 0.0
    %2267 = vmatprep.subr.mxu0 0.0
    %2268 = vmatpush1.msra.mxu0 0.0
    %2269 = vmatprep.subr.mxu0 0.0
    %2270 = vmatpush1.msra.mxu0 0.0
    %2271 = vmatprep.subr.mxu0 0.0
    %2272 = vmatpush1.msra.mxu0 0.0
    %2273 = vmatprep.subr.mxu0 0.0
    %2274 = vmatpush1.msra.mxu0 0.0
    %2275 = vmatprep.subr.mxu0 0.0
    %2276 = vmatpush1.msra.mxu0 0.0
    %2277 = vmatprep.subr.mxu0 0.0
    %2278 = vmatpush1.msra.mxu0 0.0
    %2279 = vmatprep.subr.mxu0 0.0
    %2280 = vmatpush1.msra.mxu0 0.0
    %2281 = vmatprep.subr.mxu0 0.0
    %2282 = vmatpush1.msra.mxu0 0.0
    %2283 = vmatprep.subr.mxu0 0.0
    %2284 = vmatpush1.msra.mxu0 0.0
    %2285 = vmatprep.subr.mxu0 0.0
    %2286 = vmatpush1.msra.mxu0 0.0
    %2287 = vmatprep.subr.mxu0 0.0
    %2288 = vmatpush1.msra.mxu0 0.0
    %2289 = vmatprep.subr.mxu0 0.0
    %2290 = vmatpush1.msra.mxu0 0.0
    %2291 = vmatprep.subr.mxu0 0.0
    %2292 = vmatpush1.msra.mxu0 0.0
    %2293 = vmatprep.subr.mxu0 0.0
    %2294 = vmatpush1.msra.mxu0 0.0
    %2295 = vmatprep.subr.mxu0 0.0
    %2296 = vmatpush1.msra.mxu0 0.0
    %2297 = vmatprep.subr.mxu0 0.0
    %2298 = vmatpush1.msra.mxu0 0.0
    %2299 = vmatprep.mubr.f32.mxu0 0.0
    %2300 = vmatmul.mubr.f32.gmra.mrb[0].mxu0 %v2233
    %v2301 = vpop.f32.mrb[0].mxu0
    %v2302 = vadd.f32 %v2230, %v2301
    %v2303 = vpop.f32.mrb[0].mxu0
    %2304 = vdwg.mxu0
    %vm2305 = vcmask 15360
    %v2306 = vsel %vm2305, %v2302, -inf
    %2307 = vmax.xlane.f32.xlu0 %v2306
    %v2308 = vpop.xlane.xlu0 %2307
    %v2309 = vsub.f32 %v2302, %v2308
    %v2310 = vmul.f32 %v2309, 1.442695
    %v2311 = vpow.pop %v2310
    %v2312 = vsel %vm2305, %v2311, 0.0
    %2313 = vadd.xlane.f32.xlu0 %v2312
    %v2314 = vpop.xlane.xlu0 %2313
    %v2315 = vlog2.pop %v2314
    %v2316 = vmul.f32 %v2315, 0.6931472
    %v2317 = vsub.f32 %v2309, %v2316
    %2318 = vst.msk [vmem:[%s16] sm:$0xff] %vm2305, %v2317
    // Predicated region
    $region58: #{tpu_custom_call.1} parent=1 // pred_check
      _
    $region59: #{tpu_custom_call.1} parent=1 // pred_check_branch
      %2320 = sbr.rel (0) target = $region61
    $region60: #{tpu_custom_call.1} parent=1 // pred_region
      %s2322 = ssub.s32 256, 256
      %2323 = vsyncadd [#allocation3], %s2322
      %s2324 = sshll.u32 [#allocation2], 4
      %s2325 = int_to_ptr.vmem [resolvable:$true] %s2324
      %2330 = dma.vmem_to_hbm [thread:$0]  %s2325, 256, %s14, [#allocation3], 32, 32, 2
    $region61: #{tpu_custom_call.1} parent=1 // pred_fallthru
      _
    // Predicated region
    $region62: #{tpu_custom_call.1} parent=1 // pred_check
      _
    $region63: #{tpu_custom_call.1} parent=1 // pred_check_branch
      %2332 = sbr.rel (0) target = $region65
    $region64: #{tpu_custom_call.1} parent=1 // pred_region
      %s2334 = ssub.s32 128, 128
      %2335 = vsyncadd [#allocation5], %s2334
      %s2337 = sshll.u32 [#allocation4], 4
      %s2338 = int_to_ptr.vmem [resolvable:$true] %s2337
      %2340 = dma.vmem_to_hbm [thread:$0]  %s2338, 128, %s15, [#allocation5]
    $region65: #{tpu_custom_call.1} parent=1 // pred_fallthru
      _
    // Predicated region
    $region66: #{tpu_custom_call.1} parent=1 // pred_check
      _
    $region67: #{tpu_custom_call.1} parent=1 // pred_check_branch
      %2342 = sbr.rel (0) target = $region69
    $region68: #{tpu_custom_call.1} parent=1 // pred_region
      _
    $region69: #{tpu_custom_call.1} parent=1 // pred_fallthru
      _
    // Predicated region
    $region70: #{tpu_custom_call.1} parent=1 // pred_check
      _
    $region71: #{tpu_custom_call.1} parent=1 // pred_check_branch
      %2344 = sbr.rel (0) target = $region73
    $region72: #{tpu_custom_call.1} parent=1 // pred_region
      %2345 = dma.done [#allocation3], 256
    $region73: #{tpu_custom_call.1} parent=1 // pred_fallthru
      _
    // Predicated region
    $region74: #{tpu_custom_call.1} parent=1 // pred_check
      _
    $region75: #{tpu_custom_call.1} parent=1 // pred_check_branch
      %2347 = sbr.rel (0) target = $region77
    $region76: #{tpu_custom_call.1} parent=1 // pred_region
      %2348 = dma.done [#allocation5], 128
    $region77: #{tpu_custom_call.1} parent=1 // pred_fallthru
      _
    // Predicated region
    $region78: #{tpu_custom_call.1} parent=1 // pred_check
      _
    $region79: #{tpu_custom_call.1} parent=1 // pred_check_branch
      %2350 = sbr.rel (0) target = $region81
    $region80: #{tpu_custom_call.1} parent=1 // pred_region
      _
    $region81: #{tpu_custom_call.1} parent=1 // pred_fallthru
      _
    %2351 = vsyncpa [#allocation3], 1
    %2352 = vsyncpa [#allocation5], 1

</llo_original>
